<compile_context>
chip_gen: v5e
topology: v5e:2x2
jax: 0.10.0
libtpu: 0.0.40
codegen_flags: <defaults>
</compile_context>

<pallas_src>
import functools

import jax
import jax.numpy as jnp
import numpy as np
from jax.experimental import pallas as pl
from jax.experimental.pallas import tpu as pltpu


# Weight / per-tile buffers are tiny here; this just leaves headroom and stays
# under v7x's 64 MiB physical VMEM (re-derive row tiles there for huge W*C).
_VMEM_LIMIT = 48 * 1024 * 1024


# ------------------------------ fused Pallas kernel -------------------------- #

def _dsconv_fused_kernel(act, has_res, has_halo, kh, kw, ph, pw, *refs):
    # Ref layout (all VMEM blocks):
    #   x_body : (1, TH, W, Cin)  bf16   body rows of this tile
    #   x_top  : (1, ph, W, Cin)  bf16   rows above (garbage at t==0, masked)
    #   x_bot  : (1, ph, W, Cin)  bf16   rows below (garbage at t==T-1, masked)
    #   w_dw   : (kh*kw, Cin)     f32    depthwise taps
    #   s1,b1  : (1, Cin)         f32    folded BN1
    #   w2     : (Cin, 4Cin)      bf16   1x1 expand
    #   s2,b2  : (1, 4Cin)        f32    folded BN2
    #   w3     : (4Cin, Cout)     bf16   1x1 project
    #   we     : (Cin, Cout)      bf16   conv_end residual (optional)
    #   o_ref  : (1, TH, W, Cout) bf16
    idx = 0
    x_body = refs[idx]; idx += 1
    if has_halo:
        x_top, x_bot = refs[idx], refs[idx + 1]; idx += 2
    else:
        x_top = x_bot = None
    w_dw, s1, b1, w2, s2, b2, w3 = refs[idx:idx + 7]; idx += 7
    we = None
    if has_res:
        we = refs[idx]; idx += 1
    o_ref = refs[idx]

    t = pl.program_id(1)
    nt = pl.num_programs(1)
    _, th, wdt, cout = o_ref.shape
    c = x_body.shape[3]

    # ---- depthwise kxk conv + folded BN1 (VPU, f32 accumulation) ------------
    body = x_body[0].astype(jnp.float32)                     # (TH, W, C), one cast
    if has_halo:
        tmask = (t > 0).astype(jnp.float32)                  # zero "same" padding
        bmask = (t < nt - 1).astype(jnp.float32)              # at image borders
        top = x_top[0].astype(jnp.float32) * tmask
        bot = x_bot[0].astype(jnp.float32) * bmask
        slab = jnp.concatenate([top, body, bot], axis=0)      # (TH+2ph, W, C)
    else:
        slab = body
    if pw > 0:
        zc = jnp.zeros((slab.shape[0], pw, c), jnp.float32)
        slab = jnp.concatenate([zc, slab, zc], axis=1)         # (TH+2ph, W+2pw, C)

    taps = w_dw[...]                                           # resident, (kh*kw, C)
    acc = jnp.zeros((th, wdt, c), jnp.float32)
    for dy in range(kh):                                       # static k*k unroll
        for dx in range(kw):
            acc = acc + slab[dy:dy + th, dx:dx + wdt, :] * taps[dy * kw + dx]
    y = acc * s1[0] + b1[0]                                    # folded BN1 (f32)

    # ---- fused pointwise chain on the MXU (bf16 operands, f32 acc) ----------
    m = th * wdt
    y2 = y.reshape(m, c).astype(jnp.bfloat16)
    h = jnp.dot(y2, w2[...], preferred_element_type=jnp.float32)
    h = h * s2[...] + b2[...]                                  # folded BN2 (f32)
    if act == "relu":
        h = jnp.maximum(h, 0.0)
    elif act == "hardswish":
        h = h * jnp.clip(h + 3.0, 0.0, 6.0) * (1.0 / 6.0)
    # act is None when if_act=False.
    out = jnp.dot(h.astype(jnp.bfloat16), w3[...],
                  preferred_element_type=jnp.float32)
    if has_res:
        # conv_end on the ORIGINAL input: reuse the already-resident body tile.
        out = out + jnp.dot(x_body[0].reshape(m, c), we[...],
                            preferred_element_type=jnp.float32)
    o_ref[0] = out.reshape(th, wdt, cout).astype(o_ref.dtype)  # lane-dense store


# ------------------------------ kernel wrapper ------------------------------- #

def _fold_bn(gamma, beta, mean, var, eps=1e-5):
    scale = gamma * jax.lax.rsqrt(var + eps)
    return scale, beta - mean * scale


def _pick_row_tile(h_out, w_out, ph, target_m=2048):
    # Largest divisor of H (multiple of ph) with TH*W <= target_m.
    step = max(ph, 1)
    target = max(step, target_m // max(w_out, 1))
    best = None
    for cand in range(step, h_out + 1, step):
        if h_out % cand == 0 and cand <= target:
            best = cand
    if best is not None:
        return best
    for cand in range(step, h_out + 1, step):
        if h_out % cand == 0:
            return cand
    raise NotImplementedError("no legal row tile for this H / padding")


def dsconv_apply_nhwc(params, x_nhwc, *, kernel_size=3, padding=1, stride=1,
                      if_act=True, act="relu", row_tile=None):
    """Fused DSConv forward, NHWC in -> NHWC bf16 out (single pallas_call)."""
    if stride != 1:
        # TODO(synk): stride > 1 depthwise path not implemented in the kernel.
        raise NotImplementedError("stride > 1 not supported")
    if isinstance(padding, int):
        padding = (padding, padding)
    ph, pw = padding
    kh = kw = kernel_size
    if 2 * ph != kh - 1 or 2 * pw != kw - 1:
        # TODO(synk): only 'same' odd-kernel depthwise padding is supported.
        raise NotImplementedError("only 'same' depthwise padding supported")
    if if_act and act not in ("relu", "hardswish"):
        raise ValueError(f"unsupported activation: {act}")

    n, hgt, wid, cin = x_nhwc.shape
    c4 = params["w2"].shape[1]
    cout = params["w3"].shape[1]
    has_res = "we" in params
    has_halo = ph > 0

    th = row_tile if row_tile is not None else _pick_row_tile(hgt, wid, ph)
    assert hgt % th == 0 and (ph == 0 or th % ph == 0), (hgt, th, ph)
    nt = hgt // th

    # bf16 activations / matmul weights in HBM; f32 for BN vectors and taps.
    x = x_nhwc.astype(jnp.bfloat16)
    s1, b1 = _fold_bn(*params["bn1"])
    s2, b2 = _fold_bn(*params["bn2"])

    in_specs = [pl.BlockSpec((1, th, wid, cin), lambda i, j: (i, j, 0, 0))]
    args = [x]
    if has_halo:
        tb = th // ph                      # halo-block (ph rows) count per tile
        b_last = (hgt - ph) // ph          # last in-bounds halo block index
        in_specs += [
            # ph rows directly above / below this tile; clamped at the borders
            # (the clamped fetch is masked to zero inside the kernel).
            pl.BlockSpec((1, ph, wid, cin),
                         lambda i, j: (i, jnp.maximum(j * tb - 1, 0), 0, 0)),
            pl.BlockSpec((1, ph, wid, cin),
                         lambda i, j: (i, jnp.minimum((j + 1) * tb, b_last), 0, 0)),
        ]
        args += [x, x]
    in_specs += [
        pl.BlockSpec((kh * kw, cin), lambda i, j: (0, 0)),   # taps, resident
        pl.BlockSpec((1, cin), lambda i, j: (0, 0)),         # bn1 scale
        pl.BlockSpec((1, cin), lambda i, j: (0, 0)),         # bn1 bias
        pl.BlockSpec((cin, c4), lambda i, j: (0, 0)),        # w2, resident
        pl.BlockSpec((1, c4), lambda i, j: (0, 0)),          # bn2 scale
        pl.BlockSpec((1, c4), lambda i, j: (0, 0)),          # bn2 bias
        pl.BlockSpec((c4, cout), lambda i, j: (0, 0)),       # w3, resident
    ]
    args += [
        params["w_dw"].astype(jnp.float32),
        s1.reshape(1, cin).astype(jnp.float32),
        b1.reshape(1, cin).astype(jnp.float32),
        params["w2"].astype(jnp.bfloat16),
        s2.reshape(1, c4).astype(jnp.float32),
        b2.reshape(1, c4).astype(jnp.float32),
        params["w3"].astype(jnp.bfloat16),
    ]
    if has_res:
        in_specs.append(pl.BlockSpec((cin, cout), lambda i, j: (0, 0)))
        args.append(params["we"].astype(jnp.bfloat16))

    kern = functools.partial(_dsconv_fused_kernel, act if if_act else None,
                             has_res, has_halo, kh, kw, ph, pw)
    return pl.pallas_call(
        kern,
        out_shape=jax.ShapeDtypeStruct((n, hgt, wid, cout), jnp.bfloat16),
        grid=(n, nt),
        in_specs=in_specs,
        out_specs=pl.BlockSpec((1, th, wid, cout), lambda i, j: (i, j, 0, 0)),
        compiler_params=pltpu.CompilerParams(
            dimension_semantics=("parallel", "parallel"),
            vmem_limit_bytes=_VMEM_LIMIT),
    )(*args)


def dsconv_forward(params, x_nchw, **kwargs):
    # NCHW wrapper kept only for PyTorch-module parity; prefer the NHWC entry
    # point (dsconv_apply_nhwc) end-to-end to avoid the two layout passes.
    x = jnp.transpose(x_nchw, (0, 2, 3, 1))
    out = dsconv_apply_nhwc(params, x, **kwargs)
    return jnp.transpose(out, (0, 3, 1, 2))


# -------------------------------- params / reference ------------------------- #

def init_dsconv_params(key, in_ch, out_ch, kernel_size):
    ks = jax.random.split(key, 6)
    c4 = 4 * in_ch

    def bn(k, c):
        k1, k2, k3, k4 = jax.random.split(k, 4)
        gamma = jax.random.uniform(k1, (c,), jnp.float32, 0.5, 1.5)
        beta = 0.1 * jax.random.normal(k2, (c,), jnp.float32)
        mean = 0.1 * jax.random.normal(k3, (c,), jnp.float32)
        var = jax.random.uniform(k4, (c,), jnp.float32, 0.5, 1.5)
        return gamma, beta, mean, var

    p = {
        "w_dw": 0.1 * jax.random.normal(
            ks[0], (kernel_size * kernel_size, in_ch), jnp.float32),
        "bn1": bn(ks[1], in_ch),
        "w2": 0.1 * jax.random.normal(ks[2], (in_ch, c4), jnp.float32),
        "bn2": bn(ks[3], c4),
        "w3": 0.1 * jax.random.normal(ks[4], (c4, out_ch), jnp.float32),
    }
    if in_ch != out_ch:
        p["we"] = 0.1 * jax.random.normal(ks[5], (in_ch, out_ch), jnp.float32)
    return p


def dsconv_reference(params, x_nchw, *, kernel_size=3, padding=1, stride=1,
                     if_act=True, act="relu"):
    if isinstance(padding, int):
        padding = (padding, padding)
    x = jnp.transpose(x_nchw, (0, 2, 3, 1)).astype(jnp.float32)
    c = x.shape[-1]
    kh = kw = kernel_size
    w_dw = params["w_dw"].reshape(kh, kw, 1, c)
    y = jax.lax.conv_general_dilated(
        x, w_dw, window_strides=(stride, stride),
        padding=[(padding[0], padding[0]), (padding[1], padding[1])],
        dimension_numbers=("NHWC", "HWIO", "NHWC"),
        feature_group_count=c)
    s1, b1 = _fold_bn(*params["bn1"])
    y = y * s1 + b1
    h = y @ params["w2"]
    s2, b2 = _fold_bn(*params["bn2"])
    h = h * s2 + b2
    if if_act:
        if act == "relu":
            h = jnp.maximum(h, 0.0)
        elif act == "hardswish":
            h = h * jnp.clip(h + 3.0, 0.0, 6.0) / 6.0
    out = h @ params["w3"]
    if "we" in params:
        out = out + x @ params["we"]
    return jnp.transpose(out, (0, 3, 1, 2))


# --------------------------------------- main -------------------------------- #

if __name__ == "__main__":
    key = jax.random.PRNGKey(0)
    kx1, kp1, kx2, kp2 = jax.random.split(key, 4)

    # Case 1: in_ch != out_ch (conv_end residual), relu, 2 row tiles per image
    # (exercises the halo / border-masking path).  4*Cin=128 and Cout=128 keep
    # the MXU operands and the output store full 128-lane vectors.
    n, in_ch, hgt, wid, out_ch = 2, 32, 16, 16, 128
    x1 = jax.random.normal(kx1, (n, in_ch, hgt, wid), jnp.float32)
    p1 = init_dsconv_params(kp1, in_ch, out_ch, 3)
    fwd1 = jax.jit(lambda p, xx: dsconv_forward(
        p, xx, kernel_size=3, padding=1, stride=1, if_act=True, act="relu",
        row_tile=8))
    o1 = jax.block_until_ready(fwd1(p1, x1))
    assert o1.shape == (n, out_ch, hgt, wid), o1.shape
    r1 = dsconv_reference(p1, x1, kernel_size=3, padding=1, stride=1,
                          if_act=True, act="relu")
    np.testing.assert_allclose(np.asarray(o1.astype(jnp.float32)),
                               np.asarray(r1), rtol=3e-2, atol=3e-2)

    # Case 2: in_ch == out_ch (no residual branch), hardswish, default tiling
    # (whole image per grid step -> exercises the single-row-tile path).
    in2, out2 = 64, 64
    x2 = jax.random.normal(kx2, (n, in2, hgt, wid), jnp.float32)
    p2 = init_dsconv_params(kp2, in2, out2, 3)
    fwd2 = jax.jit(lambda p, xx: dsconv_forward(
        p, xx, kernel_size=3, padding=1, stride=1, if_act=True, act="hardswish"))
    o2 = jax.block_until_ready(fwd2(p2, x2))
    assert o2.shape == (n, out2, hgt, wid), o2.shape
    r2 = dsconv_reference(p2, x2, kernel_size=3, padding=1, stride=1,
                          if_act=True, act="hardswish")
    np.testing.assert_allclose(np.asarray(o2.astype(jnp.float32)),
                               np.asarray(r2), rtol=3e-2, atol=3e-2)

    print("KERNEL_OK")
</pallas_src>

<mosaic_0001>
module attributes {stable_mosaic.version = 11 : i64} {
  func.func @_dsconv_fused_kernel(%arg0: i32, %arg1: i32, %arg2: memref<1x8x16x32xbf16, #tpu.memory_space<vmem>>, %arg3: memref<1x1x16x32xbf16, #tpu.memory_space<vmem>>, %arg4: memref<1x1x16x32xbf16, #tpu.memory_space<vmem>>, %arg5: memref<9x32xf32, #tpu.memory_space<vmem>>, %arg6: memref<1x32xf32, #tpu.memory_space<vmem>>, %arg7: memref<1x32xf32, #tpu.memory_space<vmem>>, %arg8: memref<32x128xbf16, #tpu.memory_space<vmem>>, %arg9: memref<1x128xf32, #tpu.memory_space<vmem>>, %arg10: memref<1x128xf32, #tpu.memory_space<vmem>>, %arg11: memref<128x128xbf16, #tpu.memory_space<vmem>>, %arg12: memref<32x128xbf16, #tpu.memory_space<vmem>>, %arg13: memref<1x8x16x128xbf16, #tpu.memory_space<vmem>>) attributes {dimension_semantics = [#tpu.dimension_semantics<parallel>, #tpu.dimension_semantics<parallel>], iteration_bounds = array<i64: 2, 2>, scalar_prefetch = 0 : i64, scratch_operands = 0 : i64, tpu.core_type = #tpu.core_type<tc>, window_params = [{transform_indices = @transform_0, window_bounds = array<i64: 1, 8, 16, 32>}, {transform_indices = @transform_1, window_bounds = array<i64: 1, 1, 16, 32>}, {transform_indices = @transform_2, window_bounds = array<i64: 1, 1, 16, 32>}, {pipeline_mode = #tpu.pipeline_mode<synchronous>, transform_indices = @transform_3, window_bounds = array<i64: 9, 32>}, {pipeline_mode = #tpu.pipeline_mode<synchronous>, transform_indices = @transform_4, window_bounds = array<i64: 1, 32>}, {pipeline_mode = #tpu.pipeline_mode<synchronous>, transform_indices = @transform_5, window_bounds = array<i64: 1, 32>}, {pipeline_mode = #tpu.pipeline_mode<synchronous>, transform_indices = @transform_6, window_bounds = array<i64: 32, 128>}, {pipeline_mode = #tpu.pipeline_mode<synchronous>, transform_indices = @transform_7, window_bounds = array<i64: 1, 128>}, {pipeline_mode = #tpu.pipeline_mode<synchronous>, transform_indices = @transform_8, window_bounds = array<i64: 1, 128>}, {pipeline_mode = #tpu.pipeline_mode<synchronous>, transform_indices = @transform_9, window_bounds = array<i64: 128, 128>}, {pipeline_mode = #tpu.pipeline_mode<synchronous>, transform_indices = @transform_10, window_bounds = array<i64: 32, 128>}, {transform_indices = @transform_11, window_bounds = array<i64: 1, 8, 16, 128>}]} {
    %c0 = arith.constant 0 : index
    %c0_0 = arith.constant 0 : index
    %c0_1 = arith.constant 0 : index
    %c0_2 = arith.constant 0 : index
    %0 = vector.load %arg2[%c0, %c0_0, %c0_1, %c0_2] : memref<1x8x16x32xbf16, #tpu.memory_space<vmem>>, vector<1x8x16x32xbf16>
    %1 = vector.shape_cast %0 : vector<1x8x16x32xbf16> to vector<8x16x32xbf16>
    %2 = arith.extf %1 : vector<8x16x32xbf16> to vector<8x16x32xf32>
    %c0_i32 = arith.constant 0 : i32
    %3 = arith.cmpi sgt, %arg1, %c0_i32 : i32
    %4 = arith.extui %3 : i1 to i32
    %5 = arith.sitofp %4 : i32 to f32
    %c1_i32 = arith.constant 1 : i32
    %6 = arith.cmpi slt, %arg1, %c1_i32 : i32
    %7 = arith.extui %6 : i1 to i32
    %8 = arith.sitofp %7 : i32 to f32
    %c0_3 = arith.constant 0 : index
    %c0_4 = arith.constant 0 : index
    %c0_5 = arith.constant 0 : index
    %c0_6 = arith.constant 0 : index
    %9 = vector.load %arg3[%c0_3, %c0_4, %c0_5, %c0_6] : memref<1x1x16x32xbf16, #tpu.memory_space<vmem>>, vector<1x1x16x32xbf16>
    %10 = vector.shape_cast %9 : vector<1x1x16x32xbf16> to vector<1x16x32xbf16>
    %11 = arith.extf %10 : vector<1x16x32xbf16> to vector<1x16x32xf32>
    %12 = vector.broadcast %5 : f32 to vector<1x16x32xf32>
    %13 = arith.mulf %11, %12 : vector<1x16x32xf32>
    %c0_7 = arith.constant 0 : index
    %c0_8 = arith.constant 0 : index
    %c0_9 = arith.constant 0 : index
    %c0_10 = arith.constant 0 : index
    %14 = vector.load %arg4[%c0_7, %c0_8, %c0_9, %c0_10] : memref<1x1x16x32xbf16, #tpu.memory_space<vmem>>, vector<1x1x16x32xbf16>
    %15 = vector.shape_cast %14 : vector<1x1x16x32xbf16> to vector<1x16x32xbf16>
    %16 = arith.extf %15 : vector<1x16x32xbf16> to vector<1x16x32xf32>
    %17 = vector.broadcast %8 : f32 to vector<1x16x32xf32>
    %18 = arith.mulf %16, %17 : vector<1x16x32xf32>
    %19 = tpu.concatenate %13, %2, %18 in 0 : vector<1x16x32xf32>, vector<8x16x32xf32>, vector<1x16x32xf32> -> vector<10x16x32xf32>
    %cst = arith.constant 0.000000e+00 : f32
    %20 = vector.broadcast %cst : f32 to vector<10x1x32xf32>
    %21 = tpu.concatenate %20, %19, %20 in 1 : vector<10x1x32xf32>, vector<10x16x32xf32>, vector<10x1x32xf32> -> vector<10x18x32xf32>
    %c0_11 = arith.constant 0 : index
    %c0_12 = arith.constant 0 : index
    %22 = vector.load %arg5[%c0_11, %c0_12] : memref<9x32xf32, #tpu.memory_space<vmem>>, vector<9x32xf32>
    %cst_13 = arith.constant 0.000000e+00 : f32
    %23 = vector.broadcast %cst_13 : f32 to vector<8x16x32xf32>
    %24 = vector.extract_strided_slice %21 {offsets = [0, 0, 0], sizes = [8, 16, 32], strides = [1, 1, 1]} : vector<10x18x32xf32> to vector<8x16x32xf32>
    %25 = vector.extract_strided_slice %22 {offsets = [0, 0], sizes = [1, 32], strides = [1, 1]} : vector<9x32xf32> to vector<1x32xf32>
    %26 = vector.shape_cast %25 : vector<1x32xf32> to vector<32xf32>
    %27 = vector.shape_cast %26 : vector<32xf32> to vector<1x1x32xf32>
    %28 = vector.broadcast %27 : vector<1x1x32xf32> to vector<8x16x32xf32>
    %29 = arith.mulf %24, %28 : vector<8x16x32xf32>
    %30 = arith.addf %23, %29 : vector<8x16x32xf32>
    %31 = vector.extract_strided_slice %21 {offsets = [0, 1, 0], sizes = [8, 16, 32], strides = [1, 1, 1]} : vector<10x18x32xf32> to vector<8x16x32xf32>
    %32 = vector.extract_strided_slice %22 {offsets = [1, 0], sizes = [1, 32], strides = [1, 1]} : vector<9x32xf32> to vector<1x32xf32>
    %33 = vector.shape_cast %32 : vector<1x32xf32> to vector<32xf32>
    %34 = vector.shape_cast %33 : vector<32xf32> to vector<1x1x32xf32>
    %35 = vector.broadcast %34 : vector<1x1x32xf32> to vector<8x16x32xf32>
    %36 = arith.mulf %31, %35 : vector<8x16x32xf32>
    %37 = arith.addf %30, %36 : vector<8x16x32xf32>
    %38 = vector.extract_strided_slice %21 {offsets = [0, 2, 0], sizes = [8, 16, 32], strides = [1, 1, 1]} : vector<10x18x32xf32> to vector<8x16x32xf32>
    %39 = vector.extract_strided_slice %22 {offsets = [2, 0], sizes = [1, 32], strides = [1, 1]} : vector<9x32xf32> to vector<1x32xf32>
    %40 = vector.shape_cast %39 : vector<1x32xf32> to vector<32xf32>
    %41 = vector.shape_cast %40 : vector<32xf32> to vector<1x1x32xf32>
    %42 = vector.broadcast %41 : vector<1x1x32xf32> to vector<8x16x32xf32>
    %43 = arith.mulf %38, %42 : vector<8x16x32xf32>
    %44 = arith.addf %37, %43 : vector<8x16x32xf32>
    %45 = vector.extract_strided_slice %21 {offsets = [1, 0, 0], sizes = [8, 16, 32], strides = [1, 1, 1]} : vector<10x18x32xf32> to vector<8x16x32xf32>
    %46 = vector.extract_strided_slice %22 {offsets = [3, 0], sizes = [1, 32], strides = [1, 1]} : vector<9x32xf32> to vector<1x32xf32>
    %47 = vector.shape_cast %46 : vector<1x32xf32> to vector<32xf32>
    %48 = vector.shape_cast %47 : vector<32xf32> to vector<1x1x32xf32>
    %49 = vector.broadcast %48 : vector<1x1x32xf32> to vector<8x16x32xf32>
    %50 = arith.mulf %45, %49 : vector<8x16x32xf32>
    %51 = arith.addf %44, %50 : vector<8x16x32xf32>
    %52 = vector.extract_strided_slice %21 {offsets = [1, 1, 0], sizes = [8, 16, 32], strides = [1, 1, 1]} : vector<10x18x32xf32> to vector<8x16x32xf32>
    %53 = vector.extract_strided_slice %22 {offsets = [4, 0], sizes = [1, 32], strides = [1, 1]} : vector<9x32xf32> to vector<1x32xf32>
    %54 = vector.shape_cast %53 : vector<1x32xf32> to vector<32xf32>
    %55 = vector.shape_cast %54 : vector<32xf32> to vector<1x1x32xf32>
    %56 = vector.broadcast %55 : vector<1x1x32xf32> to vector<8x16x32xf32>
    %57 = arith.mulf %52, %56 : vector<8x16x32xf32>
    %58 = arith.addf %51, %57 : vector<8x16x32xf32>
    %59 = vector.extract_strided_slice %21 {offsets = [1, 2, 0], sizes = [8, 16, 32], strides = [1, 1, 1]} : vector<10x18x32xf32> to vector<8x16x32xf32>
    %60 = vector.extract_strided_slice %22 {offsets = [5, 0], sizes = [1, 32], strides = [1, 1]} : vector<9x32xf32> to vector<1x32xf32>
    %61 = vector.shape_cast %60 : vector<1x32xf32> to vector<32xf32>
    %62 = vector.shape_cast %61 : vector<32xf32> to vector<1x1x32xf32>
    %63 = vector.broadcast %62 : vector<1x1x32xf32> to vector<8x16x32xf32>
    %64 = arith.mulf %59, %63 : vector<8x16x32xf32>
    %65 = arith.addf %58, %64 : vector<8x16x32xf32>
    %66 = vector.extract_strided_slice %21 {offsets = [2, 0, 0], sizes = [8, 16, 32], strides = [1, 1, 1]} : vector<10x18x32xf32> to vector<8x16x32xf32>
    %67 = vector.extract_strided_slice %22 {offsets = [6, 0], sizes = [1, 32], strides = [1, 1]} : vector<9x32xf32> to vector<1x32xf32>
    %68 = vector.shape_cast %67 : vector<1x32xf32> to vector<32xf32>
    %69 = vector.shape_cast %68 : vector<32xf32> to vector<1x1x32xf32>
    %70 = vector.broadcast %69 : vector<1x1x32xf32> to vector<8x16x32xf32>
    %71 = arith.mulf %66, %70 : vector<8x16x32xf32>
    %72 = arith.addf %65, %71 : vector<8x16x32xf32>
    %73 = vector.extract_strided_slice %21 {offsets = [2, 1, 0], sizes = [8, 16, 32], strides = [1, 1, 1]} : vector<10x18x32xf32> to vector<8x16x32xf32>
    %74 = vector.extract_strided_slice %22 {offsets = [7, 0], sizes = [1, 32], strides = [1, 1]} : vector<9x32xf32> to vector<1x32xf32>
    %75 = vector.shape_cast %74 : vector<1x32xf32> to vector<32xf32>
    %76 = vector.shape_cast %75 : vector<32xf32> to vector<1x1x32xf32>
    %77 = vector.broadcast %76 : vector<1x1x32xf32> to vector<8x16x32xf32>
    %78 = arith.mulf %73, %77 : vector<8x16x32xf32>
    %79 = arith.addf %72, %78 : vector<8x16x32xf32>
    %80 = vector.extract_strided_slice %21 {offsets = [2, 2, 0], sizes = [8, 16, 32], strides = [1, 1, 1]} : vector<10x18x32xf32> to vector<8x16x32xf32>
    %81 = vector.extract_strided_slice %22 {offsets = [8, 0], sizes = [1, 32], strides = [1, 1]} : vector<9x32xf32> to vector<1x32xf32>
    %82 = vector.shape_cast %81 : vector<1x32xf32> to vector<32xf32>
    %83 = vector.shape_cast %82 : vector<32xf32> to vector<1x1x32xf32>
    %84 = vector.broadcast %83 : vector<1x1x32xf32> to vector<8x16x32xf32>
    %85 = arith.mulf %80, %84 : vector<8x16x32xf32>
    %86 = arith.addf %79, %85 : vector<8x16x32xf32>
    %c0_14 = arith.constant 0 : index
    %c0_15 = arith.constant 0 : index
    %87 = vector.load %arg6[%c0_14, %c0_15] : memref<1x32xf32, #tpu.memory_space<vmem>>, vector<1x32xf32>
    %88 = vector.shape_cast %87 : vector<1x32xf32> to vector<32xf32>
    %89 = vector.shape_cast %88 : vector<32xf32> to vector<1x1x32xf32>
    %90 = vector.broadcast %89 : vector<1x1x32xf32> to vector<8x16x32xf32>
    %91 = arith.mulf %86, %90 : vector<8x16x32xf32>
    %c0_16 = arith.constant 0 : index
    %c0_17 = arith.constant 0 : index
    %92 = vector.load %arg7[%c0_16, %c0_17] : memref<1x32xf32, #tpu.memory_space<vmem>>, vector<1x32xf32>
    %93 = vector.shape_cast %92 : vector<1x32xf32> to vector<32xf32>
    %94 = vector.shape_cast %93 : vector<32xf32> to vector<1x1x32xf32>
    %95 = vector.broadcast %94 : vector<1x1x32xf32> to vector<8x16x32xf32>
    %96 = arith.addf %91, %95 : vector<8x16x32xf32>
    %97 = vector.shape_cast %96 : vector<8x16x32xf32> to vector<128x32xf32>
    %98 = arith.truncf %97 : vector<128x32xf32> to vector<128x32xbf16>
    %c0_18 = arith.constant 0 : index
    %c0_19 = arith.constant 0 : index
    %99 = vector.load %arg8[%c0_18, %c0_19] : memref<32x128xbf16, #tpu.memory_space<vmem>>, vector<32x128xbf16>
    %cst_20 = arith.constant dense<0.000000e+00> : vector<128x128xf32>
    %100 = tpu.matmul %98, %99, %cst_20 {dimension_numbers = #tpu.dot_dimension_numbers<[1], [0], [0], [1], [0, 0, 1, 1], [], []>} : vector<128x32xbf16>, vector<32x128xbf16>, vector<128x128xf32> -> vector<128x128xf32>
    %c0_21 = arith.constant 0 : index
    %c0_22 = arith.constant 0 : index
    %101 = vector.load %arg9[%c0_21, %c0_22] : memref<1x128xf32, #tpu.memory_space<vmem>>, vector<1x128xf32>
    %102 = vector.broadcast %101 : vector<1x128xf32> to vector<128x128xf32>
    %103 = arith.mulf %100, %102 : vector<128x128xf32>
    %c0_23 = arith.constant 0 : index
    %c0_24 = arith.constant 0 : index
    %104 = vector.load %arg10[%c0_23, %c0_24] : memref<1x128xf32, #tpu.memory_space<vmem>>, vector<1x128xf32>
    %105 = vector.broadcast %104 : vector<1x128xf32> to vector<128x128xf32>
    %106 = arith.addf %103, %105 : vector<128x128xf32>
    %cst_25 = arith.constant 0.000000e+00 : f32
    %107 = vector.broadcast %cst_25 : f32 to vector<128x128xf32>
    %108 = arith.maximumf %106, %107 : vector<128x128xf32>
    %109 = arith.truncf %108 : vector<128x128xf32> to vector<128x128xbf16>
    %c0_26 = arith.constant 0 : index
    %c0_27 = arith.constant 0 : index
    %110 = vector.load %arg11[%c0_26, %c0_27] : memref<128x128xbf16, #tpu.memory_space<vmem>>, vector<128x128xbf16>
    %cst_28 = arith.constant dense<0.000000e+00> : vector<128x128xf32>
    %111 = tpu.matmul %109, %110, %cst_28 {dimension_numbers = #tpu.dot_dimension_numbers<[1], [0], [0], [1], [0, 0, 1, 1], [], []>} : vector<128x128xbf16>, vector<128x128xbf16>, vector<128x128xf32> -> vector<128x128xf32>
    %c0_29 = arith.constant 0 : index
    %c0_30 = arith.constant 0 : index
    %c0_31 = arith.constant 0 : index
    %c0_32 = arith.constant 0 : index
    %112 = vector.load %arg2[%c0_29, %c0_30, %c0_31, %c0_32] : memref<1x8x16x32xbf16, #tpu.memory_space<vmem>>, vector<1x8x16x32xbf16>
    %113 = vector.shape_cast %112 : vector<1x8x16x32xbf16> to vector<8x16x32xbf16>
    %114 = vector.shape_cast %113 : vector<8x16x32xbf16> to vector<128x32xbf16>
    %c0_33 = arith.constant 0 : index
    %c0_34 = arith.constant 0 : index
    %115 = vector.load %arg12[%c0_33, %c0_34] : memref<32x128xbf16, #tpu.memory_space<vmem>>, vector<32x128xbf16>
    %cst_35 = arith.constant dense<0.000000e+00> : vector<128x128xf32>
    %116 = tpu.matmul %114, %115, %cst_35 {dimension_numbers = #tpu.dot_dimension_numbers<[1], [0], [0], [1], [0, 0, 1, 1], [], []>} : vector<128x32xbf16>, vector<32x128xbf16>, vector<128x128xf32> -> vector<128x128xf32>
    %117 = arith.addf %111, %116 : vector<128x128xf32>
    %118 = vector.shape_cast %117 : vector<128x128xf32> to vector<8x16x128xf32>
    %119 = arith.truncf %118 : vector<8x16x128xf32> to vector<8x16x128xbf16>
    %c0_36 = arith.constant 0 : index
    %c0_37 = arith.constant 0 : index
    %c0_38 = arith.constant 0 : index
    %c0_39 = arith.constant 0 : index
    %120 = vector.load %arg13[%c0_36, %c0_37, %c0_38, %c0_39] : memref<1x8x16x128xbf16, #tpu.memory_space<vmem>>, vector<1x8x16x128xbf16>
    %121 = vector.shape_cast %120 : vector<1x8x16x128xbf16> to vector<8x16x128xbf16>
    %122 = vector.shape_cast %119 : vector<8x16x128xbf16> to vector<1x8x16x128xbf16>
    tpu.vector_store %arg13[%c0_36, %c0_37, %c0_38, %c0_39], %122 {strides = array<i32>} : memref<1x8x16x128xbf16, #tpu.memory_space<vmem>>, vector<1x8x16x128xbf16>,
    return
  }
  func.func @transform_0(%arg0: i32, %arg1: i32) -> (i32, i32, i32, i32) {
    %c0_i32 = arith.constant 0 : i32
    %c0_i32_0 = arith.constant 0 : i32
    %c0_i32_1 = arith.constant 0 : i32
    return %arg0, %arg1, %c0_i32, %c0_i32_0 : i32, i32, i32, i32
  }
  func.func @transform_1(%arg0: i32, %arg1: i32) -> (i32, i32, i32, i32) {
    %c8_i32 = arith.constant 8 : i32
    %0 = arith.muli %arg1, %c8_i32 : i32
    %c1_i32 = arith.constant 1 : i32
    %1 = arith.subi %0, %c1_i32 : i32
    %c0_i32 = arith.constant 0 : i32
    %2 = arith.maxsi %1, %c0_i32 : i32
    %c0_i32_0 = arith.constant 0 : i32
    %c0_i32_1 = arith.constant 0 : i32
    %c0_i32_2 = arith.constant 0 : i32
    return %arg0, %2, %c0_i32_0, %c0_i32_1 : i32, i32, i32, i32
  }
  func.func @transform_2(%arg0: i32, %arg1: i32) -> (i32, i32, i32, i32) {
    %c1_i32 = arith.constant 1 : i32
    %0 = arith.addi %arg1, %c1_i32 : i32
    %c8_i32 = arith.constant 8 : i32
    %1 = arith.muli %0, %c8_i32 : i32
    %c15_i32 = arith.constant 15 : i32
    %2 = arith.minsi %1, %c15_i32 : i32
    %c0_i32 = arith.constant 0 : i32
    %c0_i32_0 = arith.constant 0 : i32
    %c0_i32_1 = arith.constant 0 : i32
    return %arg0, %2, %c0_i32, %c0_i32_0 : i32, i32, i32, i32
  }
  func.func @transform_3(%arg0: i32, %arg1: i32) -> (i32, i32) {
    %c0_i32 = arith.constant 0 : i32
    %c0_i32_0 = arith.constant 0 : i32
    %c0_i32_1 = arith.constant 0 : i32
    return %c0_i32, %c0_i32_0 : i32, i32
  }
  func.func @transform_4(%arg0: i32, %arg1: i32) -> (i32, i32) {
    %c0_i32 = arith.constant 0 : i32
    %c0_i32_0 = arith.constant 0 : i32
    %c0_i32_1 = arith.constant 0 : i32
    return %c0_i32, %c0_i32_0 : i32, i32
  }
  func.func @transform_5(%arg0: i32, %arg1: i32) -> (i32, i32) {
    %c0_i32 = arith.constant 0 : i32
    %c0_i32_0 = arith.constant 0 : i32
    %c0_i32_1 = arith.constant 0 : i32
    return %c0_i32, %c0_i32_0 : i32, i32
  }
  func.func @transform_6(%arg0: i32, %arg1: i32) -> (i32, i32) {
    %c0_i32 = arith.constant 0 : i32
    %c0_i32_0 = arith.constant 0 : i32
    %c0_i32_1 = arith.constant 0 : i32
    return %c0_i32, %c0_i32_0 : i32, i32
  }
  func.func @transform_7(%arg0: i32, %arg1: i32) -> (i32, i32) {
    %c0_i32 = arith.constant 0 : i32
    %c0_i32_0 = arith.constant 0 : i32
    %c0_i32_1 = arith.constant 0 : i32
    return %c0_i32, %c0_i32_0 : i32, i32
  }
  func.func @transform_8(%arg0: i32, %arg1: i32) -> (i32, i32) {
    %c0_i32 = arith.constant 0 : i32
    %c0_i32_0 = arith.constant 0 : i32
    %c0_i32_1 = arith.constant 0 : i32
    return %c0_i32, %c0_i32_0 : i32, i32
  }
  func.func @transform_9(%arg0: i32, %arg1: i32) -> (i32, i32) {
    %c0_i32 = arith.constant 0 : i32
    %c0_i32_0 = arith.constant 0 : i32
    %c0_i32_1 = arith.constant 0 : i32
    return %c0_i32, %c0_i32_0 : i32, i32
  }
  func.func @transform_10(%arg0: i32, %arg1: i32) -> (i32, i32) {
    %c0_i32 = arith.constant 0 : i32
    %c0_i32_0 = arith.constant 0 : i32
    %c0_i32_1 = arith.constant 0 : i32
    return %c0_i32, %c0_i32_0 : i32, i32
  }
  func.func @transform_11(%arg0: i32, %arg1: i32) -> (i32, i32, i32, i32) {
    %c0_i32 = arith.constant 0 : i32
    %c0_i32_0 = arith.constant 0 : i32
    %c0_i32_1 = arith.constant 0 : i32
    return %arg0, %arg1, %c0_i32, %c0_i32_0 : i32, i32, i32, i32
  }
}

</mosaic_0001>

<llo_original>
// kernel: _lambda_.1
$region0: #{_lambda_.1}
  #allocation0 [shape = 'u32[]', space=smem, size = 0x4, offset = 0x4, fixed_abs, tag = 'smem constant byte address 0x4 - core index']
  #allocation1 [shape = 'u32[72,128]{1,0:T(1,128)}', space=vmem, size = 0x9000, scoped, tag = 'internal scratch']
  %s0 = inlined_call_operand.vmem [shape: bf16[2,16,16,32], index: 0, kind: input, shape index: {}, may-alias: {0,1,2}]
  %s1 = inlined_call_operand.vmem [shape: bf16[2,16,16,32], index: 1, kind: input, shape index: {}, may-alias: {0,1,2}]
  %s2 = inlined_call_operand.vmem [shape: bf16[2,16,16,32], index: 2, kind: input, shape index: {}, may-alias: {0,1,2}]
  %s3 = inlined_call_operand.vmem [shape: f32[9,32], index: 3, kind: input, shape index: {}]
  %s4 = inlined_call_operand.vmem [shape: f32[1,32], index: 4, kind: input, shape index: {}]
  %s5 = inlined_call_operand.vmem [shape: f32[1,32], index: 5, kind: input, shape index: {}]
  %s6 = inlined_call_operand.vmem [shape: bf16[32,128], index: 6, kind: input, shape index: {}]
  %s7 = inlined_call_operand.vmem [shape: f32[1,128], index: 7, kind: input, shape index: {}]
  %s8 = inlined_call_operand.vmem [shape: f32[1,128], index: 8, kind: input, shape index: {}]
  %s9 = inlined_call_operand.vmem [shape: bf16[128,128], index: 9, kind: input, shape index: {}]
  %s10 = inlined_call_operand.vmem [shape: bf16[32,128], index: 10, kind: input, shape index: {}]
  %s11 = inlined_call_operand.hbm [shape: bf16[2,16,16,128], index: 11, kind: output, shape index: {}]
  %s12 = sld [smem:[#allocation0]]
  $region77: #{_lambda_.1} parent=0
    _
  %s14 = ssub.s32 1, %s12
  %s15 = scalar_select 0, %s14, %s12
  $region1: #{_lambda_.1} parent=0
    #allocation2 [shape = 'u8[65536]{0}', space=vmem, size = 0x10000, scoped, tag = 'output window, operand 0']
    #allocation3 [shape = 's32[2]{0}', space=sflag, size = 0x8, scoped, tag = 'scoped memory for _lambda_.1']
    %16 = vsyncpa [#allocation3], 0
    %s17 = scalar_lea.sflag [#allocation3], 1
    %18 = vsyncpa %s17, 0
    loop: start=0, step=1, limit=6
    $region2: #{_lambda_.1} parent=1 // loop_pre_header
      _
    $region3: #{_lambda_.1} parent=1 // loop_header
      %s20 = sphi 0, %s24
      %p21 = scmp.ge.s32.totalorder %s20, 6
      %s27 = sphi 0, %s39
      %s28 = sphi 0, %s35
      %s29 = sphi 0, %s27
      %s30 = sphi 0, %s28
      %s31 = sphi 0, %s29
      %s32 = sphi 0, %s30
      %s44 = sphi 0, %s46
      %s47 = sphi 0, %s44
      %s48 = sphi 0, %s47
      %s64 = sphi 0, %s48
      %s80 = sphi 0, %s82
      %s83 = sphi 0, %s80
      %s84 = sphi 0, %s83
      %s100 = sphi 0, %s84
      %s116 = sphi 0, %s118
      %s119 = sphi 0, %s116
      %s120 = sphi 0, %s119
      %s136 = sphi 0, %s120
      %s140 = sphi 0, %s140
      %s142 = sphi 0, %s140
      %s143 = sphi 0, %s142
      %s157 = sphi 0, %s143
      %s161 = sphi 0, %s161
      %s163 = sphi 0, %s161
      %s164 = sphi 0, %s163
      %s178 = sphi 0, %s164
      %s182 = sphi 0, %s182
      %s184 = sphi 0, %s182
      %s185 = sphi 0, %s184
      %s199 = sphi 0, %s185
      %s203 = sphi 0, %s203
      %s205 = sphi 0, %s203
      %s206 = sphi 0, %s205
      %s220 = sphi 0, %s206
      %s224 = sphi 0, %s224
      %s226 = sphi 0, %s224
      %s227 = sphi 0, %s226
      %s241 = sphi 0, %s227
      %s245 = sphi 0, %s245
      %s247 = sphi 0, %s245
      %s248 = sphi 0, %s247
      %s262 = sphi 0, %s248
      %s266 = sphi 0, %s266
      %s268 = sphi 0, %s266
      %s269 = sphi 0, %s268
      %s283 = sphi 0, %s269
      %s287 = sphi 0, %s287
      %s289 = sphi 0, %s287
      %s290 = sphi 0, %s289
      %s304 = sphi 0, %s290
      %s312 = sphi 0, %s314
      %s315 = sphi 0, %s312
      %s316 = sphi 0, %s315
      %s332 = sphi 0, %s316
    $region4: #{_lambda_.1} parent=1 // loop_header_branch
      %23 = sbr.rel (%p21) target = $region8
    $region5: #{_lambda_.1} parent=1 // loop_body
      %s25 = ssub.s32 %s20, 1
      %s26 = ssub.s32 %s20, 2
      %s33 = sadd.s32 1, %s28
      %p34 = scmp.ge.s32.totalorder %s33, 2
      %s35 = scalar_select %p34, 0, %s33
      %s36 = sadd.s32 1, %s27
      %s37 = scalar_select %p34, %s36, %s27
      %p38 = scmp.ge.s32.totalorder %s37, 2
      %s39 = scalar_select %p38, 0, %s37
      %s40 = ssub.s32 %s27, %s39
      %s41 = ssub.s32 %s28, %s35
      %s42 = sor.u32 %s40, %s41
      %p43 = scmp.eq.s32.totalorder %s42, 0
      %s45 = sadd.s32 %s44, 1
      %s46 = scalar_select %p43, %s44, %s45
      %p49 = pneg %p43
      %p50 = scmp.eq.s32.totalorder %s20, 3
      %p51 = por %p49, %p50
      %p52 = scmp.ne.s32.totalorder %s44, %s47
      %p53 = scmp.eq.s32.totalorder %s20, 0
      %p54 = por %p52, %p53
      %p55 = scmp.ne.s32.totalorder %s44, %s47
      %p56 = scmp.eq.s32.totalorder %s25, 3
      %p57 = por %p55, %p56
      %p58 = scmp.ne.s32.totalorder %s47, %s48
      %p59 = scmp.eq.s32.totalorder %s25, 0
      %p60 = por %p58, %p59
      %p61 = scmp.ne.s32.totalorder %s47, %s48
      %p62 = scmp.eq.s32.totalorder %s26, 3
      %p63 = por %p61, %p62
      %p65 = scmp.ne.s32.totalorder %s48, %s64
      %p66 = scmp.eq.s32.totalorder %s26, 0
      %p67 = por %p65, %p66
      %s68 = smul.u32 %s28, 8
      %s69 = ssub.s32 %s68, 1
      %p70 = scmp.gt.s32.totalorder %s69, 0
      %s71 = scalar_select %p70, %s69, 0
      %s72 = smul.u32 %s35, 8
      %s73 = ssub.s32 %s72, 1
      %p74 = scmp.gt.s32.totalorder %s73, 0
      %s75 = scalar_select %p74, %s73, 0
      %s76 = ssub.s32 %s27, %s39
      %s77 = ssub.s32 %s71, %s75
      %s78 = sor.u32 %s76, %s77
      %p79 = scmp.eq.s32.totalorder %s78, 0
      %s81 = sadd.s32 %s80, 1
      %s82 = scalar_select %p79, %s80, %s81
      %p85 = pneg %p79
      %p86 = scmp.eq.s32.totalorder %s20, 3
      %p87 = por %p85, %p86
      %p88 = scmp.ne.s32.totalorder %s80, %s83
      %p89 = scmp.eq.s32.totalorder %s20, 0
      %p90 = por %p88, %p89
      %p91 = scmp.ne.s32.totalorder %s80, %s83
      %p92 = scmp.eq.s32.totalorder %s25, 3
      %p93 = por %p91, %p92
      %p94 = scmp.ne.s32.totalorder %s83, %s84
      %p95 = scmp.eq.s32.totalorder %s25, 0
      %p96 = por %p94, %p95
      %p97 = scmp.ne.s32.totalorder %s83, %s84
      %p98 = scmp.eq.s32.totalorder %s26, 3
      %p99 = por %p97, %p98
      %p101 = scmp.ne.s32.totalorder %s84, %s100
      %p102 = scmp.eq.s32.totalorder %s26, 0
      %p103 = por %p101, %p102
      %s104 = sadd.s32 %s28, 1
      %s105 = smul.u32 %s104, 8
      %p106 = scmp.lt.s32.totalorder %s105, 15
      %s107 = scalar_select %p106, %s105, 15
      %s108 = sadd.s32 %s35, 1
      %s109 = smul.u32 %s108, 8
      %p110 = scmp.lt.s32.totalorder %s109, 15
      %s111 = scalar_select %p110, %s109, 15
      %s112 = ssub.s32 %s27, %s39
      %s113 = ssub.s32 %s107, %s111
      %s114 = sor.u32 %s112, %s113
      %p115 = scmp.eq.s32.totalorder %s114, 0
      %s117 = sadd.s32 %s116, 1
      %s118 = scalar_select %p115, %s116, %s117
      %p121 = pneg %p115
      %p122 = scmp.eq.s32.totalorder %s20, 3
      %p123 = por %p121, %p122
      %p124 = scmp.ne.s32.totalorder %s116, %s119
      %p125 = scmp.eq.s32.totalorder %s20, 0
      %p126 = por %p124, %p125
      %p127 = scmp.ne.s32.totalorder %s116, %s119
      %p128 = scmp.eq.s32.totalorder %s25, 3
      %p129 = por %p127, %p128
      %p130 = scmp.ne.s32.totalorder %s119, %s120
      %p131 = scmp.eq.s32.totalorder %s25, 0
      %p132 = por %p130, %p131
      %p133 = scmp.ne.s32.totalorder %s119, %s120
      %p134 = scmp.eq.s32.totalorder %s26, 3
      %p135 = por %p133, %p134
      %p137 = scmp.ne.s32.totalorder %s120, %s136
      %p138 = scmp.eq.s32.totalorder %s26, 0
      %p139 = por %p137, %p138
      %s141 = sadd.s32 %s140, 1
      %p144 = scmp.eq.s32.totalorder %s20, 3
      %p145 = scmp.ne.s32.totalorder %s140, %s142
      %p146 = scmp.eq.s32.totalorder %s20, 0
      %p147 = por %p145, %p146
      %p148 = scmp.ne.s32.totalorder %s140, %s142
      %p149 = scmp.eq.s32.totalorder %s25, 3
      %p150 = por %p148, %p149
      %p151 = scmp.ne.s32.totalorder %s142, %s143
      %p152 = scmp.eq.s32.totalorder %s25, 0
      %p153 = por %p151, %p152
      %p154 = scmp.ne.s32.totalorder %s142, %s143
      %p155 = scmp.eq.s32.totalorder %s26, 3
      %p156 = por %p154, %p155
      %p158 = scmp.ne.s32.totalorder %s143, %s157
      %p159 = scmp.eq.s32.totalorder %s26, 0
      %p160 = por %p158, %p159
      %s162 = sadd.s32 %s161, 1
      %p165 = scmp.eq.s32.totalorder %s20, 3
      %p166 = scmp.ne.s32.totalorder %s161, %s163
      %p167 = scmp.eq.s32.totalorder %s20, 0
      %p168 = por %p166, %p167
      %p169 = scmp.ne.s32.totalorder %s161, %s163
      %p170 = scmp.eq.s32.totalorder %s25, 3
      %p171 = por %p169, %p170
      %p172 = scmp.ne.s32.totalorder %s163, %s164
      %p173 = scmp.eq.s32.totalorder %s25, 0
      %p174 = por %p172, %p173
      %p175 = scmp.ne.s32.totalorder %s163, %s164
      %p176 = scmp.eq.s32.totalorder %s26, 3
      %p177 = por %p175, %p176
      %p179 = scmp.ne.s32.totalorder %s164, %s178
      %p180 = scmp.eq.s32.totalorder %s26, 0
      %p181 = por %p179, %p180
      %s183 = sadd.s32 %s182, 1
      %p186 = scmp.eq.s32.totalorder %s20, 3
      %p187 = scmp.ne.s32.totalorder %s182, %s184
      %p188 = scmp.eq.s32.totalorder %s20, 0
      %p189 = por %p187, %p188
      %p190 = scmp.ne.s32.totalorder %s182, %s184
      %p191 = scmp.eq.s32.totalorder %s25, 3
      %p192 = por %p190, %p191
      %p193 = scmp.ne.s32.totalorder %s184, %s185
      %p194 = scmp.eq.s32.totalorder %s25, 0
      %p195 = por %p193, %p194
      %p196 = scmp.ne.s32.totalorder %s184, %s185
      %p197 = scmp.eq.s32.totalorder %s26, 3
      %p198 = por %p196, %p197
      %p200 = scmp.ne.s32.totalorder %s185, %s199
      %p201 = scmp.eq.s32.totalorder %s26, 0
      %p202 = por %p200, %p201
      %s204 = sadd.s32 %s203, 1
      %p207 = scmp.eq.s32.totalorder %s20, 3
      %p208 = scmp.ne.s32.totalorder %s203, %s205
      %p209 = scmp.eq.s32.totalorder %s20, 0
      %p210 = por %p208, %p209
      %p211 = scmp.ne.s32.totalorder %s203, %s205
      %p212 = scmp.eq.s32.totalorder %s25, 3
      %p213 = por %p211, %p212
      %p214 = scmp.ne.s32.totalorder %s205, %s206
      %p215 = scmp.eq.s32.totalorder %s25, 0
      %p216 = por %p214, %p215
      %p217 = scmp.ne.s32.totalorder %s205, %s206
      %p218 = scmp.eq.s32.totalorder %s26, 3
      %p219 = por %p217, %p218
      %p221 = scmp.ne.s32.totalorder %s206, %s220
      %p222 = scmp.eq.s32.totalorder %s26, 0
      %p223 = por %p221, %p222
      %s225 = sadd.s32 %s224, 1
      %p228 = scmp.eq.s32.totalorder %s20, 3
      %p229 = scmp.ne.s32.totalorder %s224, %s226
      %p230 = scmp.eq.s32.totalorder %s20, 0
      %p231 = por %p229, %p230
      %p232 = scmp.ne.s32.totalorder %s224, %s226
      %p233 = scmp.eq.s32.totalorder %s25, 3
      %p234 = por %p232, %p233
      %p235 = scmp.ne.s32.totalorder %s226, %s227
      %p236 = scmp.eq.s32.totalorder %s25, 0
      %p237 = por %p235, %p236
      %p238 = scmp.ne.s32.totalorder %s226, %s227
      %p239 = scmp.eq.s32.totalorder %s26, 3
      %p240 = por %p238, %p239
      %p242 = scmp.ne.s32.totalorder %s227, %s241
      %p243 = scmp.eq.s32.totalorder %s26, 0
      %p244 = por %p242, %p243
      %s246 = sadd.s32 %s245, 1
      %p249 = scmp.eq.s32.totalorder %s20, 3
      %p250 = scmp.ne.s32.totalorder %s245, %s247
      %p251 = scmp.eq.s32.totalorder %s20, 0
      %p252 = por %p250, %p251
      %p253 = scmp.ne.s32.totalorder %s245, %s247
      %p254 = scmp.eq.s32.totalorder %s25, 3
      %p255 = por %p253, %p254
      %p256 = scmp.ne.s32.totalorder %s247, %s248
      %p257 = scmp.eq.s32.totalorder %s25, 0
      %p258 = por %p256, %p257
      %p259 = scmp.ne.s32.totalorder %s247, %s248
      %p260 = scmp.eq.s32.totalorder %s26, 3
      %p261 = por %p259, %p260
      %p263 = scmp.ne.s32.totalorder %s248, %s262
      %p264 = scmp.eq.s32.totalorder %s26, 0
      %p265 = por %p263, %p264
      %s267 = sadd.s32 %s266, 1
      %p270 = scmp.eq.s32.totalorder %s20, 3
      %p271 = scmp.ne.s32.totalorder %s266, %s268
      %p272 = scmp.eq.s32.totalorder %s20, 0
      %p273 = por %p271, %p272
      %p274 = scmp.ne.s32.totalorder %s266, %s268
      %p275 = scmp.eq.s32.totalorder %s25, 3
      %p276 = por %p274, %p275
      %p277 = scmp.ne.s32.totalorder %s268, %s269
      %p278 = scmp.eq.s32.totalorder %s25, 0
      %p279 = por %p277, %p278
      %p280 = scmp.ne.s32.totalorder %s268, %s269
      %p281 = scmp.eq.s32.totalorder %s26, 3
      %p282 = por %p280, %p281
      %p284 = scmp.ne.s32.totalorder %s269, %s283
      %p285 = scmp.eq.s32.totalorder %s26, 0
      %p286 = por %p284, %p285
      %s288 = sadd.s32 %s287, 1
      %p291 = scmp.eq.s32.totalorder %s20, 3
      %p292 = scmp.ne.s32.totalorder %s287, %s289
      %p293 = scmp.eq.s32.totalorder %s20, 0
      %p294 = por %p292, %p293
      %p295 = scmp.ne.s32.totalorder %s287, %s289
      %p296 = scmp.eq.s32.totalorder %s25, 3
      %p297 = por %p295, %p296
      %p298 = scmp.ne.s32.totalorder %s289, %s290
      %p299 = scmp.eq.s32.totalorder %s25, 0
      %p300 = por %p298, %p299
      %p301 = scmp.ne.s32.totalorder %s289, %s290
      %p302 = scmp.eq.s32.totalorder %s26, 3
      %p303 = por %p301, %p302
      %p305 = scmp.ne.s32.totalorder %s290, %s304
      %p306 = scmp.eq.s32.totalorder %s26, 0
      %p307 = por %p305, %p306
      %s308 = ssub.s32 %s27, %s39
      %s309 = ssub.s32 %s28, %s35
      %s310 = sor.u32 %s308, %s309
      %p311 = scmp.eq.s32.totalorder %s310, 0
      %s313 = sadd.s32 %s312, 1
      %s314 = scalar_select %p311, %s312, %s313
      %p317 = pneg %p311
      %p318 = scmp.eq.s32.totalorder %s20, 3
      %p319 = por %p317, %p318
      %p320 = scmp.ne.s32.totalorder %s312, %s315
      %p321 = scmp.eq.s32.totalorder %s20, 0
      %p322 = por %p320, %p321
      %p323 = scmp.ne.s32.totalorder %s312, %s315
      %p324 = scmp.eq.s32.totalorder %s25, 3
      %p325 = por %p323, %p324
      %p326 = scmp.ne.s32.totalorder %s315, %s316
      %p327 = scmp.eq.s32.totalorder %s25, 0
      %p328 = por %p326, %p327
      %p329 = scmp.ne.s32.totalorder %s315, %s316
      %p330 = scmp.eq.s32.totalorder %s26, 3
      %p331 = por %p329, %p330
      %p333 = scmp.ne.s32.totalorder %s316, %s332
      %p334 = scmp.eq.s32.totalorder %s26, 0
      %p335 = por %p333, %p334
      %p336 = scmp.le.s32.totalorder 1, %s20
      %p337 = scmp.lt.s32.totalorder %s20, 5
      %p338 = pnand %p336, %p337
      %p339 = pneg %p338
      // Predicated region
      $region9: #{_lambda_.1} parent=5 // pred_check
        _
      $region10: #{_lambda_.1} parent=5 // pred_check_branch
        %341 = sbr.rel (%p338) target = $region12
      $region11: #{_lambda_.1} parent=5 // pred_region
        %s342 = ssub.s32 %s20, 1
        // Predicated region
        $region13: #{_lambda_.1} parent=11 // pred_check
          %p343 = pneg %p153
        $region14: #{_lambda_.1} parent=11 // pred_check_branch
          %345 = sbr.rel (%p343) target = $region16
        $region15: #{_lambda_.1} parent=11 // pred_region
          _
        $region16: #{_lambda_.1} parent=11 // pred_fallthru
          _
        // Predicated region
        $region17: #{_lambda_.1} parent=11 // pred_check
          %p346 = pneg %p174
        $region18: #{_lambda_.1} parent=11 // pred_check_branch
          %348 = sbr.rel (%p346) target = $region20
        $region19: #{_lambda_.1} parent=11 // pred_region
          _
        $region20: #{_lambda_.1} parent=11 // pred_fallthru
          _
        // Predicated region
        $region21: #{_lambda_.1} parent=11 // pred_check
          %p349 = pneg %p195
        $region22: #{_lambda_.1} parent=11 // pred_check_branch
          %351 = sbr.rel (%p349) target = $region24
        $region23: #{_lambda_.1} parent=11 // pred_region
          _
        $region24: #{_lambda_.1} parent=11 // pred_fallthru
          _
        // Predicated region
        $region25: #{_lambda_.1} parent=11 // pred_check
          %p352 = pneg %p216
        $region26: #{_lambda_.1} parent=11 // pred_check_branch
          %354 = sbr.rel (%p352) target = $region28
        $region27: #{_lambda_.1} parent=11 // pred_region
          _
        $region28: #{_lambda_.1} parent=11 // pred_fallthru
          _
        // Predicated region
        $region29: #{_lambda_.1} parent=11 // pred_check
          %p355 = pneg %p237
        $region30: #{_lambda_.1} parent=11 // pred_check_branch
          %357 = sbr.rel (%p355) target = $region32
        $region31: #{_lambda_.1} parent=11 // pred_region
          _
        $region32: #{_lambda_.1} parent=11 // pred_fallthru
          _
        // Predicated region
        $region33: #{_lambda_.1} parent=11 // pred_check
          %p358 = pneg %p258
        $region34: #{_lambda_.1} parent=11 // pred_check_branch
          %360 = sbr.rel (%p358) target = $region36
        $region35: #{_lambda_.1} parent=11 // pred_region
          _
        $region36: #{_lambda_.1} parent=11 // pred_fallthru
          _
        // Predicated region
        $region37: #{_lambda_.1} parent=11 // pred_check
          %p361 = pneg %p279
        $region38: #{_lambda_.1} parent=11 // pred_check_branch
          %363 = sbr.rel (%p361) target = $region40
        $region39: #{_lambda_.1} parent=11 // pred_region
          _
        $region40: #{_lambda_.1} parent=11 // pred_fallthru
          _
        // Predicated region
        $region41: #{_lambda_.1} parent=11 // pred_check
          %p364 = pneg %p300
        $region42: #{_lambda_.1} parent=11 // pred_check_branch
          %366 = sbr.rel (%p364) target = $region44
        $region43: #{_lambda_.1} parent=11 // pred_region
          _
        $region44: #{_lambda_.1} parent=11 // pred_fallthru
          _
      $region12: #{_lambda_.1} parent=5 // pred_fallthru
        _
      %p367 = scmp.lt.s32.totalorder %s20, 4
      // Predicated region
      $region45: #{_lambda_.1} parent=5 // pred_check
        %p368 = pneg %p367
      $region46: #{_lambda_.1} parent=5 // pred_check_branch
        %370 = sbr.rel (%p368) target = $region48
      $region47: #{_lambda_.1} parent=5 // pred_region
        // Predicated region
        $region49: #{_lambda_.1} parent=47 // pred_check
          %p371 = pneg %p54
        $region50: #{_lambda_.1} parent=47 // pred_check_branch
          %373 = sbr.rel (%p371) target = $region52
        $region51: #{_lambda_.1} parent=47 // pred_region
          %s374 = smul.u32 8, %s28
          %p375 = scmp.lt.s32.totalorder %s27, 1
          %s376 = scalar_select %p375, %s27, 1
          %p377 = scmp.lt.s32.totalorder %s374, 15
          %s378 = scalar_select %p377, %s374, 15
          %s379 = smul.addr %s378, 2
          %s380 = smul.addr %s376, 32
          %s381 = sadd.s32 %s379, %s380
          %s382 = smul.addr %s381, 4
          %s383 = scalar_lea.vmem %s0, %s382
          %s384 = smul.u32 8, %s28
        $region52: #{_lambda_.1} parent=47 // pred_fallthru
          _
        // Predicated region
        $region53: #{_lambda_.1} parent=47 // pred_check
          %p385 = pneg %p90
        $region54: #{_lambda_.1} parent=47 // pred_check_branch
          %387 = sbr.rel (%p385) target = $region56
        $region55: #{_lambda_.1} parent=47 // pred_region
          %s388 = smul.u32 %s28, 8
          %s389 = ssub.s32 %s388, 1
          %p390 = scmp.gt.s32.totalorder %s389, 0
          %s391 = scalar_select %p390, %s389, 0
          %p392 = scmp.lt.s32.totalorder %s27, 1
          %s393 = scalar_select %p392, %s27, 1
          %p394 = scmp.lt.s32.totalorder %s391, 15
          %s395 = scalar_select %p394, %s391, 15
          %s396 = smul.addr %s395, 2
          %s397 = smul.addr %s393, 32
          %s398 = sadd.s32 %s396, %s397
          %s399 = smul.addr %s398, 4
          %s400 = scalar_lea.vmem %s1, %s399
          %s401 = smul.u32 %s28, 8
          %s402 = ssub.s32 %s401, 1
          %p403 = scmp.gt.s32.totalorder %s402, 0
          %s404 = scalar_select %p403, %s402, 0
        $region56: #{_lambda_.1} parent=47 // pred_fallthru
          _
        // Predicated region
        $region57: #{_lambda_.1} parent=47 // pred_check
          %p405 = pneg %p126
        $region58: #{_lambda_.1} parent=47 // pred_check_branch
          %407 = sbr.rel (%p405) target = $region60
        $region59: #{_lambda_.1} parent=47 // pred_region
          %s408 = sadd.s32 %s28, 1
          %s409 = smul.u32 %s408, 8
          %p410 = scmp.lt.s32.totalorder %s409, 15
          %s411 = scalar_select %p410, %s409, 15
          %p412 = scmp.lt.s32.totalorder %s27, 1
          %s413 = scalar_select %p412, %s27, 1
          %p414 = scmp.lt.s32.totalorder %s411, 15
          %s415 = scalar_select %p414, %s411, 15
          %s416 = smul.addr %s415, 2
          %s417 = smul.addr %s413, 32
          %s418 = sadd.s32 %s416, %s417
          %s419 = smul.addr %s418, 4
          %s420 = scalar_lea.vmem %s2, %s419
          %s421 = sadd.s32 %s28, 1
          %s422 = smul.u32 %s421, 8
          %p423 = scmp.lt.s32.totalorder %s422, 15
          %s424 = scalar_select %p423, %s422, 15
        $region60: #{_lambda_.1} parent=47 // pred_fallthru
          _
      $region48: #{_lambda_.1} parent=5 // pred_fallthru
        _
      %p425 = scmp.le.s32.totalorder 1, %s20
      %p426 = scmp.lt.s32.totalorder %s20, 5
      %p427 = pnand %p425, %p426
      %p428 = pneg %p427
      // Predicated region
      $region61: #{_lambda_.1} parent=5 // pred_check
        _
      $region62: #{_lambda_.1} parent=5 // pred_check_branch
        %430 = sbr.rel (%p427) target = $region64
      $region63: #{_lambda_.1} parent=5 // pred_region
        %s431 = ssub.s32 %s20, 1
        %s432 = smul.u32 8, %s30
        %p433 = scmp.lt.s32.totalorder %s29, 1
        %s434 = scalar_select %p433, %s29, 1
        %p435 = scmp.lt.s32.totalorder %s432, 15
        %s436 = scalar_select %p435, %s432, 15
        %s437 = smul.addr %s436, 2
        %s438 = smul.addr %s434, 32
        %s439 = sadd.s32 %s437, %s438
        %s440 = smul.addr %s439, 4
        %s441 = scalar_lea.vmem %s0, %s440
        %p442 = pneg %p60
        %p443 = pneg %p57
        %s444 = smul.u32 %s30, 8
        %s445 = ssub.s32 %s444, 1
        %p446 = scmp.gt.s32.totalorder %s445, 0
        %s447 = scalar_select %p446, %s445, 0
        %p448 = scmp.lt.s32.totalorder %s29, 1
        %s449 = scalar_select %p448, %s29, 1
        %p450 = scmp.lt.s32.totalorder %s447, 15
        %s451 = scalar_select %p450, %s447, 15
        %s452 = smul.addr %s451, 2
        %s453 = smul.addr %s449, 32
        %s454 = sadd.s32 %s452, %s453
        %s455 = smul.addr %s454, 4
        %s456 = scalar_lea.vmem %s1, %s455
        %p457 = pneg %p96
        %p458 = pneg %p93
        %s459 = sadd.s32 %s30, 1
        %s460 = smul.u32 %s459, 8
        %p461 = scmp.lt.s32.totalorder %s460, 15
        %s462 = scalar_select %p461, %s460, 15
        %p463 = scmp.lt.s32.totalorder %s29, 1
        %s464 = scalar_select %p463, %s29, 1
        %p465 = scmp.lt.s32.totalorder %s462, 15
        %s466 = scalar_select %p465, %s462, 15
        %s467 = smul.addr %s466, 2
        %s468 = smul.addr %s464, 32
        %s469 = sadd.s32 %s467, %s468
        %s470 = smul.addr %s469, 4
        %s471 = scalar_lea.vmem %s2, %s470
        %p472 = pneg %p132
        %p473 = pneg %p129
        %p474 = pneg %p153
        %p475 = pneg %p150
        %p476 = pneg %p174
        %p477 = pneg %p171
        %p478 = pneg %p195
        %p479 = pneg %p192
        %p480 = pneg %p216
        %p481 = pneg %p213
        %p482 = pneg %p237
        %p483 = pneg %p234
        %p484 = pneg %p258
        %p485 = pneg %p255
        %p486 = pneg %p279
        %p487 = pneg %p276
        %p488 = pneg %p300
        %p489 = pneg %p297
        %p490 = pneg %p328
        %p491 = pneg %p325
        %s492 = sand.u32 %s315, 1
        %s493 = scalar_lea.sflag [#allocation3], %s492
        %s494 = sand.u32 %s315, 1
        %s495 = smul.addr %s494, 64
        %s496 = scalar_lea.vmem [#allocation2], %s495
        %s497 = smul.u32 8, %s30
        %p498 = scmp.lt.s32.totalorder %s29, 1
        %s499 = scalar_select %p498, %s29, 1
        %p500 = scmp.lt.s32.totalorder %s497, 15
        %s501 = scalar_select %p500, %s497, 15
        %s502 = smul.addr %s501, 2
        %s503 = smul.addr %s499, 32
        %s504 = sadd.s32 %s502, %s503
        %s505 = smul.addr %s504, 4
        %s506 = scalar_lea.vmem %s0, %s505
        %s507 = smul.u32 8, %s30
        %s508 = smul.u32 %s30, 8
        %s509 = ssub.s32 %s508, 1
        %p510 = scmp.gt.s32.totalorder %s509, 0
        %s511 = scalar_select %p510, %s509, 0
        %p512 = scmp.lt.s32.totalorder %s29, 1
        %s513 = scalar_select %p512, %s29, 1
        %p514 = scmp.lt.s32.totalorder %s511, 15
        %s515 = scalar_select %p514, %s511, 15
        %s516 = smul.addr %s515, 2
        %s517 = smul.addr %s513, 32
        %s518 = sadd.s32 %s516, %s517
        %s519 = smul.addr %s518, 4
        %s520 = scalar_lea.vmem %s1, %s519
        %s521 = smul.u32 %s30, 8
        %s522 = ssub.s32 %s521, 1
        %p523 = scmp.gt.s32.totalorder %s522, 0
        %s524 = scalar_select %p523, %s522, 0
        %s525 = sadd.s32 %s30, 1
        %s526 = smul.u32 %s525, 8
        %p527 = scmp.lt.s32.totalorder %s526, 15
        %s528 = scalar_select %p527, %s526, 15
        %p529 = scmp.lt.s32.totalorder %s29, 1
        %s530 = scalar_select %p529, %s29, 1
        %p531 = scmp.lt.s32.totalorder %s528, 15
        %s532 = scalar_select %p531, %s528, 15
        %s533 = smul.addr %s532, 2
        %s534 = smul.addr %s530, 32
        %s535 = sadd.s32 %s533, %s534
        %s536 = smul.addr %s535, 4
        %s537 = scalar_lea.vmem %s2, %s536
        %s538 = sadd.s32 %s30, 1
        %s539 = smul.u32 %s538, 8
        %p540 = scmp.lt.s32.totalorder %s539, 15
        %s541 = scalar_select %p540, %s539, 15
        %s542 = smul.u32 8, %s30
        %v544 = vld [vmem:[%s506] sm:$0xf]
        %v545 = vld [vmem:[%s506 + $0x4] sm:$0xf]
        %v546 = vld [vmem:[%s506 + $0x8] sm:$0xf]
        %v547 = vld [vmem:[%s506 + $0xc] sm:$0xf]
        %v548 = vld [vmem:[%s506 + $0x10] sm:$0xf]
        %v549 = vld [vmem:[%s506 + $0x14] sm:$0xf]
        %v550 = vld [vmem:[%s506 + $0x18] sm:$0xf]
        %v551 = vld [vmem:[%s506 + $0x1c] sm:$0xf]
        %v552 = vld [vmem:[%s506 + $0x20] sm:$0xf]
        %v553 = vld [vmem:[%s506 + $0x24] sm:$0xf]
        %v554 = vld [vmem:[%s506 + $0x28] sm:$0xf]
        %v555 = vld [vmem:[%s506 + $0x2c] sm:$0xf]
        %v556 = vld [vmem:[%s506 + $0x30] sm:$0xf]
        %v557 = vld [vmem:[%s506 + $0x34] sm:$0xf]
        %v558 = vld [vmem:[%s506 + $0x38] sm:$0xf]
        %v559 = vld [vmem:[%s506 + $0x3c] sm:$0xf]
        %v560 = vunpack.c.l.bf16 %v544
        %v561 = vunpack.c.l.bf16 %v545
        %v562 = vunpack.c.l.bf16 %v546
        %v563 = vunpack.c.l.bf16 %v547
        %v564 = vunpack.c.l.bf16 %v548
        %v565 = vunpack.c.l.bf16 %v549
        %v566 = vunpack.c.l.bf16 %v550
        %v567 = vunpack.c.l.bf16 %v551
        %v568 = vunpack.c.l.bf16 %v552
        %v569 = vunpack.c.l.bf16 %v553
        %v570 = vunpack.c.l.bf16 %v554
        %v571 = vunpack.c.l.bf16 %v555
        %v572 = vunpack.c.l.bf16 %v556
        %v573 = vunpack.c.l.bf16 %v557
        %v574 = vunpack.c.l.bf16 %v558
        %v575 = vunpack.c.l.bf16 %v559
        %p576 = scmp.gt.s32.totalorder %s30, 0
        %s577 = scalar_select %p576, 1, 0
        %s578 = scvt.s32.f32 %s577
        %p579 = scmp.lt.s32.totalorder %s30, 1
        %s580 = scalar_select %p579, 1, 0
        %s581 = scvt.s32.f32 %s580
        %v582 = vld [vmem:[%s520] sm:$0xf]
        %v583 = vld [vmem:[%s520 + $0x4] sm:$0xf]
        %v584 = vunpack.c.l.bf16 %v582
        %v585 = vunpack.c.l.bf16 %v583
        %v586 = vstv %s578
        %v587 = vmul.f32 %v584, %v586
        %v588 = vmul.f32 %v585, %v586
        %v589 = vld [vmem:[%s537] sm:$0xf]
        %v590 = vld [vmem:[%s537 + $0x4] sm:$0xf]
        %v591 = vunpack.c.l.bf16 %v589
        %v592 = vunpack.c.l.bf16 %v590
        %v593 = vstv %s581
        %v594 = vmul.f32 %v591, %v593
        %v595 = vmul.f32 %v592, %v593
        %vm616 = vcmask 1040384
        %v617 = vrot.slane %v587, 7
        %v618 = vrot.slane %v588, 7
        %v619 = vsel %vm616, %v617, %v618
        %v620 = vrot.slane %v560, 7
        %v621 = vrot.slane %v561, 7
        %v622 = vsel %vm616, %v620, %v621
        %v623 = vrot.slane %v562, 7
        %v624 = vrot.slane %v563, 7
        %v625 = vsel %vm616, %v623, %v624
        %v626 = vrot.slane %v564, 7
        %v627 = vrot.slane %v565, 7
        %v628 = vsel %vm616, %v626, %v627
        %v629 = vrot.slane %v566, 7
        %v630 = vrot.slane %v567, 7
        %v631 = vsel %vm616, %v629, %v630
        %v632 = vrot.slane %v568, 7
        %v633 = vrot.slane %v569, 7
        %v634 = vsel %vm616, %v632, %v633
        %v635 = vrot.slane %v570, 7
        %v636 = vrot.slane %v571, 7
        %v637 = vsel %vm616, %v635, %v636
        %v638 = vrot.slane %v572, 7
        %v639 = vrot.slane %v573, 7
        %v640 = vsel %vm616, %v638, %v639
        %v641 = vrot.slane %v574, 7
        %v642 = vrot.slane %v575, 7
        %v643 = vsel %vm616, %v641, %v642
        %v644 = vrot.slane %v594, 7
        %v645 = vrot.slane %v595, 7
        %v646 = vsel %vm616, %v644, %v645
        %v677 = vsel %vm616, 0.0, %v617
        %v678 = vsel %vm616, 0.0, %v620
        %v679 = vsel %vm616, 0.0, %v623
        %v680 = vsel %vm616, 0.0, %v626
        %v681 = vsel %vm616, 0.0, %v629
        %v682 = vsel %vm616, 0.0, %v632
        %v683 = vsel %vm616, 0.0, %v635
        %v684 = vsel %vm616, 0.0, %v638
        %v685 = vsel %vm616, 0.0, %v641
        %v686 = vsel %vm616, 0.0, %v644
        %v687 = vsel %vm616, %v618, 0.0
        %v688 = vsel %vm616, %v621, 0.0
        %v689 = vsel %vm616, %v624, 0.0
        %v690 = vsel %vm616, %v627, 0.0
        %v691 = vsel %vm616, %v630, 0.0
        %v692 = vsel %vm616, %v633, 0.0
        %v693 = vsel %vm616, %v636, 0.0
        %v694 = vsel %vm616, %v639, 0.0
        %v695 = vsel %vm616, %v642, 0.0
        %v696 = vsel %vm616, %v645, 0.0
        %v697 = vld [vmem:[%s3] sm:$0xff]
        %v698 = vld [vmem:[%s3 + $0x8] sm:$0x1]
        %v699 = vperm.slane %v697, 0
        %v700 = vmul.f32 %v677, %v699
        %v701 = vmul.f32 %v619, %v699
        %v702 = vmul.f32 %v678, %v699
        %v703 = vmul.f32 %v622, %v699
        %v704 = vmul.f32 %v679, %v699
        %v705 = vmul.f32 %v625, %v699
        %v706 = vmul.f32 %v680, %v699
        %v707 = vmul.f32 %v628, %v699
        %v708 = vmul.f32 %v681, %v699
        %v709 = vmul.f32 %v631, %v699
        %v710 = vmul.f32 %v682, %v699
        %v711 = vmul.f32 %v634, %v699
        %v712 = vmul.f32 %v683, %v699
        %v713 = vmul.f32 %v637, %v699
        %v714 = vmul.f32 %v684, %v699
        %v715 = vmul.f32 %v640, %v699
        %v716 = vadd.f32 %v700, 0.0
        %v717 = vadd.f32 %v701, 0.0
        %v718 = vadd.f32 %v702, 0.0
        %v719 = vadd.f32 %v703, 0.0
        %v720 = vadd.f32 %v704, 0.0
        %v721 = vadd.f32 %v705, 0.0
        %v722 = vadd.f32 %v706, 0.0
        %v723 = vadd.f32 %v707, 0.0
        %v724 = vadd.f32 %v708, 0.0
        %v725 = vadd.f32 %v709, 0.0
        %v726 = vadd.f32 %v710, 0.0
        %v727 = vadd.f32 %v711, 0.0
        %v728 = vadd.f32 %v712, 0.0
        %v729 = vadd.f32 %v713, 0.0
        %v730 = vadd.f32 %v714, 0.0
        %v731 = vadd.f32 %v715, 0.0
        %v732 = vperm.slane %v697, 1
        %v733 = vmul.f32 %v677, %v732
        %v734 = vmul.f32 %v619, %v732
        %v735 = vmul.f32 %v687, %v732
        %v736 = vmul.f32 %v678, %v732
        %v737 = vmul.f32 %v622, %v732
        %v738 = vmul.f32 %v688, %v732
        %v739 = vmul.f32 %v679, %v732
        %v740 = vmul.f32 %v625, %v732
        %v741 = vmul.f32 %v689, %v732
        %v742 = vmul.f32 %v680, %v732
        %v743 = vmul.f32 %v628, %v732
        %v744 = vmul.f32 %v690, %v732
        %v745 = vmul.f32 %v681, %v732
        %v746 = vmul.f32 %v631, %v732
        %v747 = vmul.f32 %v691, %v732
        %v748 = vmul.f32 %v682, %v732
        %v749 = vmul.f32 %v634, %v732
        %v750 = vmul.f32 %v692, %v732
        %v751 = vmul.f32 %v683, %v732
        %v752 = vmul.f32 %v637, %v732
        %v753 = vmul.f32 %v693, %v732
        %v754 = vmul.f32 %v684, %v732
        %v755 = vmul.f32 %v640, %v732
        %v756 = vmul.f32 %v694, %v732
        %vm781 = vcmask 1046528
        %v782 = vrot.slane %v733, 1
        %v783 = vrot.slane %v734, 1
        %v784 = vsel %vm781, %v782, %v783
        %v785 = vrot.slane %v735, 1
        %v786 = vsel %vm781, %v783, %v785
        %v787 = vrot.slane %v736, 1
        %v788 = vrot.slane %v737, 1
        %v789 = vsel %vm781, %v787, %v788
        %v790 = vrot.slane %v738, 1
        %v791 = vsel %vm781, %v788, %v790
        %v792 = vrot.slane %v739, 1
        %v793 = vrot.slane %v740, 1
        %v794 = vsel %vm781, %v792, %v793
        %v795 = vrot.slane %v741, 1
        %v796 = vsel %vm781, %v793, %v795
        %v797 = vrot.slane %v742, 1
        %v798 = vrot.slane %v743, 1
        %v799 = vsel %vm781, %v797, %v798
        %v800 = vrot.slane %v744, 1
        %v801 = vsel %vm781, %v798, %v800
        %v802 = vrot.slane %v745, 1
        %v803 = vrot.slane %v746, 1
        %v804 = vsel %vm781, %v802, %v803
        %v805 = vrot.slane %v747, 1
        %v806 = vsel %vm781, %v803, %v805
        %v807 = vrot.slane %v748, 1
        %v808 = vrot.slane %v749, 1
        %v809 = vsel %vm781, %v807, %v808
        %v810 = vrot.slane %v750, 1
        %v811 = vsel %vm781, %v808, %v810
        %v812 = vrot.slane %v751, 1
        %v813 = vrot.slane %v752, 1
        %v814 = vsel %vm781, %v812, %v813
        %v815 = vrot.slane %v753, 1
        %v816 = vsel %vm781, %v813, %v815
        %v817 = vrot.slane %v754, 1
        %v818 = vrot.slane %v755, 1
        %v819 = vsel %vm781, %v817, %v818
        %v820 = vrot.slane %v756, 1
        %v821 = vsel %vm781, %v818, %v820
        %v838 = vadd.f32 %v716, %v784
        %v839 = vadd.f32 %v717, %v786
        %v840 = vadd.f32 %v718, %v789
        %v841 = vadd.f32 %v719, %v791
        %v842 = vadd.f32 %v720, %v794
        %v843 = vadd.f32 %v721, %v796
        %v844 = vadd.f32 %v722, %v799
        %v845 = vadd.f32 %v723, %v801
        %v846 = vadd.f32 %v724, %v804
        %v847 = vadd.f32 %v725, %v806
        %v848 = vadd.f32 %v726, %v809
        %v849 = vadd.f32 %v727, %v811
        %v850 = vadd.f32 %v728, %v814
        %v851 = vadd.f32 %v729, %v816
        %v852 = vadd.f32 %v730, %v819
        %v853 = vadd.f32 %v731, %v821
        %v854 = vperm.slane %v697, 2
        %v855 = vmul.f32 %v677, %v854
        %v856 = vmul.f32 %v619, %v854
        %v857 = vmul.f32 %v687, %v854
        %v858 = vmul.f32 %v678, %v854
        %v859 = vmul.f32 %v622, %v854
        %v860 = vmul.f32 %v688, %v854
        %v861 = vmul.f32 %v679, %v854
        %v862 = vmul.f32 %v625, %v854
        %v863 = vmul.f32 %v689, %v854
        %v864 = vmul.f32 %v680, %v854
        %v865 = vmul.f32 %v628, %v854
        %v866 = vmul.f32 %v690, %v854
        %v867 = vmul.f32 %v681, %v854
        %v868 = vmul.f32 %v631, %v854
        %v869 = vmul.f32 %v691, %v854
        %v870 = vmul.f32 %v682, %v854
        %v871 = vmul.f32 %v634, %v854
        %v872 = vmul.f32 %v692, %v854
        %v873 = vmul.f32 %v683, %v854
        %v874 = vmul.f32 %v637, %v854
        %v875 = vmul.f32 %v693, %v854
        %v876 = vmul.f32 %v684, %v854
        %v877 = vmul.f32 %v640, %v854
        %v878 = vmul.f32 %v694, %v854
        %vm903 = vcmask 1045504
        %v904 = vrot.slane %v855, 2
        %v905 = vrot.slane %v856, 2
        %v906 = vsel %vm903, %v904, %v905
        %v907 = vrot.slane %v857, 2
        %v908 = vsel %vm903, %v905, %v907
        %v909 = vrot.slane %v858, 2
        %v910 = vrot.slane %v859, 2
        %v911 = vsel %vm903, %v909, %v910
        %v912 = vrot.slane %v860, 2
        %v913 = vsel %vm903, %v910, %v912
        %v914 = vrot.slane %v861, 2
        %v915 = vrot.slane %v862, 2
        %v916 = vsel %vm903, %v914, %v915
        %v917 = vrot.slane %v863, 2
        %v918 = vsel %vm903, %v915, %v917
        %v919 = vrot.slane %v864, 2
        %v920 = vrot.slane %v865, 2
        %v921 = vsel %vm903, %v919, %v920
        %v922 = vrot.slane %v866, 2
        %v923 = vsel %vm903, %v920, %v922
        %v924 = vrot.slane %v867, 2
        %v925 = vrot.slane %v868, 2
        %v926 = vsel %vm903, %v924, %v925
        %v927 = vrot.slane %v869, 2
        %v928 = vsel %vm903, %v925, %v927
        %v929 = vrot.slane %v870, 2
        %v930 = vrot.slane %v871, 2
        %v931 = vsel %vm903, %v929, %v930
        %v932 = vrot.slane %v872, 2
        %v933 = vsel %vm903, %v930, %v932
        %v934 = vrot.slane %v873, 2
        %v935 = vrot.slane %v874, 2
        %v936 = vsel %vm903, %v934, %v935
        %v937 = vrot.slane %v875, 2
        %v938 = vsel %vm903, %v935, %v937
        %v939 = vrot.slane %v876, 2
        %v940 = vrot.slane %v877, 2
        %v941 = vsel %vm903, %v939, %v940
        %v942 = vrot.slane %v878, 2
        %v943 = vsel %vm903, %v940, %v942
        %v960 = vadd.f32 %v838, %v906
        %v961 = vadd.f32 %v839, %v908
        %v962 = vadd.f32 %v840, %v911
        %v963 = vadd.f32 %v841, %v913
        %v964 = vadd.f32 %v842, %v916
        %v965 = vadd.f32 %v843, %v918
        %v966 = vadd.f32 %v844, %v921
        %v967 = vadd.f32 %v845, %v923
        %v968 = vadd.f32 %v846, %v926
        %v969 = vadd.f32 %v847, %v928
        %v970 = vadd.f32 %v848, %v931
        %v971 = vadd.f32 %v849, %v933
        %v972 = vadd.f32 %v850, %v936
        %v973 = vadd.f32 %v851, %v938
        %v974 = vadd.f32 %v852, %v941
        %v975 = vadd.f32 %v853, %v943
        %v976 = vperm.slane %v697, 3
        %v977 = vmul.f32 %v678, %v976
        %v978 = vmul.f32 %v622, %v976
        %v979 = vmul.f32 %v679, %v976
        %v980 = vmul.f32 %v625, %v976
        %v981 = vmul.f32 %v680, %v976
        %v982 = vmul.f32 %v628, %v976
        %v983 = vmul.f32 %v681, %v976
        %v984 = vmul.f32 %v631, %v976
        %v985 = vmul.f32 %v682, %v976
        %v986 = vmul.f32 %v634, %v976
        %v987 = vmul.f32 %v683, %v976
        %v988 = vmul.f32 %v637, %v976
        %v989 = vmul.f32 %v684, %v976
        %v990 = vmul.f32 %v640, %v976
        %v991 = vmul.f32 %v685, %v976
        %v992 = vmul.f32 %v643, %v976
        %v993 = vadd.f32 %v960, %v977
        %v994 = vadd.f32 %v961, %v978
        %v995 = vadd.f32 %v962, %v979
        %v996 = vadd.f32 %v963, %v980
        %v997 = vadd.f32 %v964, %v981
        %v998 = vadd.f32 %v965, %v982
        %v999 = vadd.f32 %v966, %v983
        %v1000 = vadd.f32 %v967, %v984
        %v1001 = vadd.f32 %v968, %v985
        %v1002 = vadd.f32 %v969, %v986
        %v1003 = vadd.f32 %v970, %v987
        %v1004 = vadd.f32 %v971, %v988
        %v1005 = vadd.f32 %v972, %v989
        %v1006 = vadd.f32 %v973, %v990
        %v1007 = vadd.f32 %v974, %v991
        %v1008 = vadd.f32 %v975, %v992
        %v1009 = vperm.slane %v697, 4
        %v1010 = vmul.f32 %v678, %v1009
        %v1011 = vmul.f32 %v622, %v1009
        %v1012 = vmul.f32 %v688, %v1009
        %v1013 = vmul.f32 %v679, %v1009
        %v1014 = vmul.f32 %v625, %v1009
        %v1015 = vmul.f32 %v689, %v1009
        %v1016 = vmul.f32 %v680, %v1009
        %v1017 = vmul.f32 %v628, %v1009
        %v1018 = vmul.f32 %v690, %v1009
        %v1019 = vmul.f32 %v681, %v1009
        %v1020 = vmul.f32 %v631, %v1009
        %v1021 = vmul.f32 %v691, %v1009
        %v1022 = vmul.f32 %v682, %v1009
        %v1023 = vmul.f32 %v634, %v1009
        %v1024 = vmul.f32 %v692, %v1009
        %v1025 = vmul.f32 %v683, %v1009
        %v1026 = vmul.f32 %v637, %v1009
        %v1027 = vmul.f32 %v693, %v1009
        %v1028 = vmul.f32 %v684, %v1009
        %v1029 = vmul.f32 %v640, %v1009
        %v1030 = vmul.f32 %v694, %v1009
        %v1031 = vmul.f32 %v685, %v1009
        %v1032 = vmul.f32 %v643, %v1009
        %v1033 = vmul.f32 %v695, %v1009
        %v1058 = vrot.slane %v1010, 1
        %v1059 = vrot.slane %v1011, 1
        %v1060 = vsel %vm781, %v1058, %v1059
        %v1061 = vrot.slane %v1012, 1
        %v1062 = vsel %vm781, %v1059, %v1061
        %v1063 = vrot.slane %v1013, 1
        %v1064 = vrot.slane %v1014, 1
        %v1065 = vsel %vm781, %v1063, %v1064
        %v1066 = vrot.slane %v1015, 1
        %v1067 = vsel %vm781, %v1064, %v1066
        %v1068 = vrot.slane %v1016, 1
        %v1069 = vrot.slane %v1017, 1
        %v1070 = vsel %vm781, %v1068, %v1069
        %v1071 = vrot.slane %v1018, 1
        %v1072 = vsel %vm781, %v1069, %v1071
        %v1073 = vrot.slane %v1019, 1
        %v1074 = vrot.slane %v1020, 1
        %v1075 = vsel %vm781, %v1073, %v1074
        %v1076 = vrot.slane %v1021, 1
        %v1077 = vsel %vm781, %v1074, %v1076
        %v1078 = vrot.slane %v1022, 1
        %v1079 = vrot.slane %v1023, 1
        %v1080 = vsel %vm781, %v1078, %v1079
        %v1081 = vrot.slane %v1024, 1
        %v1082 = vsel %vm781, %v1079, %v1081
        %v1083 = vrot.slane %v1025, 1
        %v1084 = vrot.slane %v1026, 1
        %v1085 = vsel %vm781, %v1083, %v1084
        %v1086 = vrot.slane %v1027, 1
        %v1087 = vsel %vm781, %v1084, %v1086
        %v1088 = vrot.slane %v1028, 1
        %v1089 = vrot.slane %v1029, 1
        %v1090 = vsel %vm781, %v1088, %v1089
        %v1091 = vrot.slane %v1030, 1
        %v1092 = vsel %vm781, %v1089, %v1091
        %v1093 = vrot.slane %v1031, 1
        %v1094 = vrot.slane %v1032, 1
        %v1095 = vsel %vm781, %v1093, %v1094
        %v1096 = vrot.slane %v1033, 1
        %v1097 = vsel %vm781, %v1094, %v1096
        %v1114 = vadd.f32 %v993, %v1060
        %v1115 = vadd.f32 %v994, %v1062
        %v1116 = vadd.f32 %v995, %v1065
        %v1117 = vadd.f32 %v996, %v1067
        %v1118 = vadd.f32 %v997, %v1070
        %v1119 = vadd.f32 %v998, %v1072
        %v1120 = vadd.f32 %v999, %v1075
        %v1121 = vadd.f32 %v1000, %v1077
        %v1122 = vadd.f32 %v1001, %v1080
        %v1123 = vadd.f32 %v1002, %v1082
        %v1124 = vadd.f32 %v1003, %v1085
        %v1125 = vadd.f32 %v1004, %v1087
        %v1126 = vadd.f32 %v1005, %v1090
        %v1127 = vadd.f32 %v1006, %v1092
        %v1128 = vadd.f32 %v1007, %v1095
        %v1129 = vadd.f32 %v1008, %v1097
        %v1130 = vperm.slane %v697, 5
        %v1131 = vmul.f32 %v678, %v1130
        %v1132 = vmul.f32 %v622, %v1130
        %v1133 = vmul.f32 %v688, %v1130
        %v1134 = vmul.f32 %v679, %v1130
        %v1135 = vmul.f32 %v625, %v1130
        %v1136 = vmul.f32 %v689, %v1130
        %v1137 = vmul.f32 %v680, %v1130
        %v1138 = vmul.f32 %v628, %v1130
        %v1139 = vmul.f32 %v690, %v1130
        %v1140 = vmul.f32 %v681, %v1130
        %v1141 = vmul.f32 %v631, %v1130
        %v1142 = vmul.f32 %v691, %v1130
        %v1143 = vmul.f32 %v682, %v1130
        %v1144 = vmul.f32 %v634, %v1130
        %v1145 = vmul.f32 %v692, %v1130
        %v1146 = vmul.f32 %v683, %v1130
        %v1147 = vmul.f32 %v637, %v1130
        %v1148 = vmul.f32 %v693, %v1130
        %v1149 = vmul.f32 %v684, %v1130
        %v1150 = vmul.f32 %v640, %v1130
        %v1151 = vmul.f32 %v694, %v1130
        %v1152 = vmul.f32 %v685, %v1130
        %v1153 = vmul.f32 %v643, %v1130
        %v1154 = vmul.f32 %v695, %v1130
        %v1179 = vrot.slane %v1131, 2
        %v1180 = vrot.slane %v1132, 2
        %v1181 = vsel %vm903, %v1179, %v1180
        %v1182 = vrot.slane %v1133, 2
        %v1183 = vsel %vm903, %v1180, %v1182
        %v1184 = vrot.slane %v1134, 2
        %v1185 = vrot.slane %v1135, 2
        %v1186 = vsel %vm903, %v1184, %v1185
        %v1187 = vrot.slane %v1136, 2
        %v1188 = vsel %vm903, %v1185, %v1187
        %v1189 = vrot.slane %v1137, 2
        %v1190 = vrot.slane %v1138, 2
        %v1191 = vsel %vm903, %v1189, %v1190
        %v1192 = vrot.slane %v1139, 2
        %v1193 = vsel %vm903, %v1190, %v1192
        %v1194 = vrot.slane %v1140, 2
        %v1195 = vrot.slane %v1141, 2
        %v1196 = vsel %vm903, %v1194, %v1195
        %v1197 = vrot.slane %v1142, 2
        %v1198 = vsel %vm903, %v1195, %v1197
        %v1199 = vrot.slane %v1143, 2
        %v1200 = vrot.slane %v1144, 2
        %v1201 = vsel %vm903, %v1199, %v1200
        %v1202 = vrot.slane %v1145, 2
        %v1203 = vsel %vm903, %v1200, %v1202
        %v1204 = vrot.slane %v1146, 2
        %v1205 = vrot.slane %v1147, 2
        %v1206 = vsel %vm903, %v1204, %v1205
        %v1207 = vrot.slane %v1148, 2
        %v1208 = vsel %vm903, %v1205, %v1207
        %v1209 = vrot.slane %v1149, 2
        %v1210 = vrot.slane %v1150, 2
        %v1211 = vsel %vm903, %v1209, %v1210
        %v1212 = vrot.slane %v1151, 2
        %v1213 = vsel %vm903, %v1210, %v1212
        %v1214 = vrot.slane %v1152, 2
        %v1215 = vrot.slane %v1153, 2
        %v1216 = vsel %vm903, %v1214, %v1215
        %v1217 = vrot.slane %v1154, 2
        %v1218 = vsel %vm903, %v1215, %v1217
        %v1235 = vadd.f32 %v1114, %v1181
        %v1236 = vadd.f32 %v1115, %v1183
        %v1237 = vadd.f32 %v1116, %v1186
        %v1238 = vadd.f32 %v1117, %v1188
        %v1239 = vadd.f32 %v1118, %v1191
        %v1240 = vadd.f32 %v1119, %v1193
        %v1241 = vadd.f32 %v1120, %v1196
        %v1242 = vadd.f32 %v1121, %v1198
        %v1243 = vadd.f32 %v1122, %v1201
        %v1244 = vadd.f32 %v1123, %v1203
        %v1245 = vadd.f32 %v1124, %v1206
        %v1246 = vadd.f32 %v1125, %v1208
        %v1247 = vadd.f32 %v1126, %v1211
        %v1248 = vadd.f32 %v1127, %v1213
        %v1249 = vadd.f32 %v1128, %v1216
        %v1250 = vadd.f32 %v1129, %v1218
        %v1251 = vperm.slane %v697, 6
        %v1252 = vmul.f32 %v679, %v1251
        %v1253 = vmul.f32 %v625, %v1251
        %v1254 = vmul.f32 %v680, %v1251
        %v1255 = vmul.f32 %v628, %v1251
        %v1256 = vmul.f32 %v681, %v1251
        %v1257 = vmul.f32 %v631, %v1251
        %v1258 = vmul.f32 %v682, %v1251
        %v1259 = vmul.f32 %v634, %v1251
        %v1260 = vmul.f32 %v683, %v1251
        %v1261 = vmul.f32 %v637, %v1251
        %v1262 = vmul.f32 %v684, %v1251
        %v1263 = vmul.f32 %v640, %v1251
        %v1264 = vmul.f32 %v685, %v1251
        %v1265 = vmul.f32 %v643, %v1251
        %v1266 = vmul.f32 %v686, %v1251
        %v1267 = vmul.f32 %v646, %v1251
        %v1268 = vadd.f32 %v1235, %v1252
        %v1269 = vadd.f32 %v1236, %v1253
        %v1270 = vadd.f32 %v1237, %v1254
        %v1271 = vadd.f32 %v1238, %v1255
        %v1272 = vadd.f32 %v1239, %v1256
        %v1273 = vadd.f32 %v1240, %v1257
        %v1274 = vadd.f32 %v1241, %v1258
        %v1275 = vadd.f32 %v1242, %v1259
        %v1276 = vadd.f32 %v1243, %v1260
        %v1277 = vadd.f32 %v1244, %v1261
        %v1278 = vadd.f32 %v1245, %v1262
        %v1279 = vadd.f32 %v1246, %v1263
        %v1280 = vadd.f32 %v1247, %v1264
        %v1281 = vadd.f32 %v1248, %v1265
        %v1282 = vadd.f32 %v1249, %v1266
        %v1283 = vadd.f32 %v1250, %v1267
        %v1284 = vperm.slane %v697, 7
        %v1285 = vmul.f32 %v679, %v1284
        %v1286 = vmul.f32 %v625, %v1284
        %v1287 = vmul.f32 %v689, %v1284
        %v1288 = vmul.f32 %v680, %v1284
        %v1289 = vmul.f32 %v628, %v1284
        %v1290 = vmul.f32 %v690, %v1284
        %v1291 = vmul.f32 %v681, %v1284
        %v1292 = vmul.f32 %v631, %v1284
        %v1293 = vmul.f32 %v691, %v1284
        %v1294 = vmul.f32 %v682, %v1284
        %v1295 = vmul.f32 %v634, %v1284
        %v1296 = vmul.f32 %v692, %v1284
        %v1297 = vmul.f32 %v683, %v1284
        %v1298 = vmul.f32 %v637, %v1284
        %v1299 = vmul.f32 %v693, %v1284
        %v1300 = vmul.f32 %v684, %v1284
        %v1301 = vmul.f32 %v640, %v1284
        %v1302 = vmul.f32 %v694, %v1284
        %v1303 = vmul.f32 %v685, %v1284
        %v1304 = vmul.f32 %v643, %v1284
        %v1305 = vmul.f32 %v695, %v1284
        %v1306 = vmul.f32 %v686, %v1284
        %v1307 = vmul.f32 %v646, %v1284
        %v1308 = vmul.f32 %v696, %v1284
        %v1333 = vrot.slane %v1285, 1
        %v1334 = vrot.slane %v1286, 1
        %v1335 = vsel %vm781, %v1333, %v1334
        %v1336 = vrot.slane %v1287, 1
        %v1337 = vsel %vm781, %v1334, %v1336
        %v1338 = vrot.slane %v1288, 1
        %v1339 = vrot.slane %v1289, 1
        %v1340 = vsel %vm781, %v1338, %v1339
        %v1341 = vrot.slane %v1290, 1
        %v1342 = vsel %vm781, %v1339, %v1341
        %v1343 = vrot.slane %v1291, 1
        %v1344 = vrot.slane %v1292, 1
        %v1345 = vsel %vm781, %v1343, %v1344
        %v1346 = vrot.slane %v1293, 1
        %v1347 = vsel %vm781, %v1344, %v1346
        %v1348 = vrot.slane %v1294, 1
        %v1349 = vrot.slane %v1295, 1
        %v1350 = vsel %vm781, %v1348, %v1349
        %v1351 = vrot.slane %v1296, 1
        %v1352 = vsel %vm781, %v1349, %v1351
        %v1353 = vrot.slane %v1297, 1
        %v1354 = vrot.slane %v1298, 1
        %v1355 = vsel %vm781, %v1353, %v1354
        %v1356 = vrot.slane %v1299, 1
        %v1357 = vsel %vm781, %v1354, %v1356
        %v1358 = vrot.slane %v1300, 1
        %v1359 = vrot.slane %v1301, 1
        %v1360 = vsel %vm781, %v1358, %v1359
        %v1361 = vrot.slane %v1302, 1
        %v1362 = vsel %vm781, %v1359, %v1361
        %v1363 = vrot.slane %v1303, 1
        %v1364 = vrot.slane %v1304, 1
        %v1365 = vsel %vm781, %v1363, %v1364
        %v1366 = vrot.slane %v1305, 1
        %v1367 = vsel %vm781, %v1364, %v1366
        %v1368 = vrot.slane %v1306, 1
        %v1369 = vrot.slane %v1307, 1
        %v1370 = vsel %vm781, %v1368, %v1369
        %v1371 = vrot.slane %v1308, 1
        %v1372 = vsel %vm781, %v1369, %v1371
        %v1389 = vadd.f32 %v1268, %v1335
        %v1390 = vadd.f32 %v1269, %v1337
        %v1391 = vadd.f32 %v1270, %v1340
        %v1392 = vadd.f32 %v1271, %v1342
        %v1393 = vadd.f32 %v1272, %v1345
        %v1394 = vadd.f32 %v1273, %v1347
        %v1395 = vadd.f32 %v1274, %v1350
        %v1396 = vadd.f32 %v1275, %v1352
        %v1397 = vadd.f32 %v1276, %v1355
        %v1398 = vadd.f32 %v1277, %v1357
        %v1399 = vadd.f32 %v1278, %v1360
        %v1400 = vadd.f32 %v1279, %v1362
        %v1401 = vadd.f32 %v1280, %v1365
        %v1402 = vadd.f32 %v1281, %v1367
        %v1403 = vadd.f32 %v1282, %v1370
        %v1404 = vadd.f32 %v1283, %v1372
        %v1405 = vperm.slane %v698, 0
        %v1406 = vmul.f32 %v679, %v1405
        %v1407 = vmul.f32 %v625, %v1405
        %v1408 = vmul.f32 %v689, %v1405
        %v1409 = vmul.f32 %v680, %v1405
        %v1410 = vmul.f32 %v628, %v1405
        %v1411 = vmul.f32 %v690, %v1405
        %v1412 = vmul.f32 %v681, %v1405
        %v1413 = vmul.f32 %v631, %v1405
        %v1414 = vmul.f32 %v691, %v1405
        %v1415 = vmul.f32 %v682, %v1405
        %v1416 = vmul.f32 %v634, %v1405
        %v1417 = vmul.f32 %v692, %v1405
        %v1418 = vmul.f32 %v683, %v1405
        %v1419 = vmul.f32 %v637, %v1405
        %v1420 = vmul.f32 %v693, %v1405
        %v1421 = vmul.f32 %v684, %v1405
        %v1422 = vmul.f32 %v640, %v1405
        %v1423 = vmul.f32 %v694, %v1405
        %v1424 = vmul.f32 %v685, %v1405
        %v1425 = vmul.f32 %v643, %v1405
        %v1426 = vmul.f32 %v695, %v1405
        %v1427 = vmul.f32 %v686, %v1405
        %v1428 = vmul.f32 %v646, %v1405
        %v1429 = vmul.f32 %v696, %v1405
        %v1454 = vrot.slane %v1406, 2
        %v1455 = vrot.slane %v1407, 2
        %v1456 = vsel %vm903, %v1454, %v1455
        %v1457 = vrot.slane %v1408, 2
        %v1458 = vsel %vm903, %v1455, %v1457
        %v1459 = vrot.slane %v1409, 2
        %v1460 = vrot.slane %v1410, 2
        %v1461 = vsel %vm903, %v1459, %v1460
        %v1462 = vrot.slane %v1411, 2
        %v1463 = vsel %vm903, %v1460, %v1462
        %v1464 = vrot.slane %v1412, 2
        %v1465 = vrot.slane %v1413, 2
        %v1466 = vsel %vm903, %v1464, %v1465
        %v1467 = vrot.slane %v1414, 2
        %v1468 = vsel %vm903, %v1465, %v1467
        %v1469 = vrot.slane %v1415, 2
        %v1470 = vrot.slane %v1416, 2
        %v1471 = vsel %vm903, %v1469, %v1470
        %v1472 = vrot.slane %v1417, 2
        %v1473 = vsel %vm903, %v1470, %v1472
        %v1474 = vrot.slane %v1418, 2
        %v1475 = vrot.slane %v1419, 2
        %v1476 = vsel %vm903, %v1474, %v1475
        %v1477 = vrot.slane %v1420, 2
        %v1478 = vsel %vm903, %v1475, %v1477
        %v1479 = vrot.slane %v1421, 2
        %v1480 = vrot.slane %v1422, 2
        %v1481 = vsel %vm903, %v1479, %v1480
        %v1482 = vrot.slane %v1423, 2
        %v1483 = vsel %vm903, %v1480, %v1482
        %v1484 = vrot.slane %v1424, 2
        %v1485 = vrot.slane %v1425, 2
        %v1486 = vsel %vm903, %v1484, %v1485
        %v1487 = vrot.slane %v1426, 2
        %v1488 = vsel %vm903, %v1485, %v1487
        %v1489 = vrot.slane %v1427, 2
        %v1490 = vrot.slane %v1428, 2
        %v1491 = vsel %vm903, %v1489, %v1490
        %v1492 = vrot.slane %v1429, 2
        %v1493 = vsel %vm903, %v1490, %v1492
        %v1510 = vadd.f32 %v1389, %v1456
        %v1511 = vadd.f32 %v1390, %v1458
        %v1512 = vadd.f32 %v1391, %v1461
        %v1513 = vadd.f32 %v1392, %v1463
        %v1514 = vadd.f32 %v1393, %v1466
        %v1515 = vadd.f32 %v1394, %v1468
        %v1516 = vadd.f32 %v1395, %v1471
        %v1517 = vadd.f32 %v1396, %v1473
        %v1518 = vadd.f32 %v1397, %v1476
        %v1519 = vadd.f32 %v1398, %v1478
        %v1520 = vadd.f32 %v1399, %v1481
        %v1521 = vadd.f32 %v1400, %v1483
        %v1522 = vadd.f32 %v1401, %v1486
        %v1523 = vadd.f32 %v1402, %v1488
        %v1524 = vadd.f32 %v1403, %v1491
        %v1525 = vadd.f32 %v1404, %v1493
        %v1526 = vld [vmem:[%s4] sm:$0x1]
        %v1528 = vperm.slane %v1526, 0
        %v1530 = vmul.f32 %v1510, %v1528
        %v1531 = vmul.f32 %v1511, %v1528
        %v1532 = vmul.f32 %v1512, %v1528
        %v1533 = vmul.f32 %v1513, %v1528
        %v1534 = vmul.f32 %v1514, %v1528
        %v1535 = vmul.f32 %v1515, %v1528
        %v1536 = vmul.f32 %v1516, %v1528
        %v1537 = vmul.f32 %v1517, %v1528
        %v1538 = vmul.f32 %v1518, %v1528
        %v1539 = vmul.f32 %v1519, %v1528
        %v1540 = vmul.f32 %v1520, %v1528
        %v1541 = vmul.f32 %v1521, %v1528
        %v1542 = vmul.f32 %v1522, %v1528
        %v1543 = vmul.f32 %v1523, %v1528
        %v1544 = vmul.f32 %v1524, %v1528
        %v1545 = vmul.f32 %v1525, %v1528
        %v1546 = vld [vmem:[%s5] sm:$0x1]
        %v1548 = vperm.slane %v1546, 0
        %v1550 = vadd.f32 %v1530, %v1548
        %v1551 = vadd.f32 %v1531, %v1548
        %v1552 = vadd.f32 %v1532, %v1548
        %v1553 = vadd.f32 %v1533, %v1548
        %v1554 = vadd.f32 %v1534, %v1548
        %v1555 = vadd.f32 %v1535, %v1548
        %v1556 = vadd.f32 %v1536, %v1548
        %v1557 = vadd.f32 %v1537, %v1548
        %v1558 = vadd.f32 %v1538, %v1548
        %v1559 = vadd.f32 %v1539, %v1548
        %v1560 = vadd.f32 %v1540, %v1548
        %v1561 = vadd.f32 %v1541, %v1548
        %v1562 = vadd.f32 %v1542, %v1548
        %v1563 = vadd.f32 %v1543, %v1548
        %v1564 = vadd.f32 %v1544, %v1548
        %v1565 = vadd.f32 %v1545, %v1548
        %v1566 = vpack.c.bf16 %v1551, %v1550
        %v1567 = vpack.c.bf16 %v1553, %v1552
        %v1568 = vpack.c.bf16 %v1555, %v1554
        %v1569 = vpack.c.bf16 %v1557, %v1556
        %v1570 = vpack.c.bf16 %v1559, %v1558
        %v1571 = vpack.c.bf16 %v1561, %v1560
        %v1572 = vpack.c.bf16 %v1563, %v1562
        %v1573 = vpack.c.bf16 %v1565, %v1564
        %v1574 = vld [vmem:[%s6] sm:$0xf]
        %v1575 = vld [vmem:[%s6 + $0x4] sm:$0xf]
        %v1576 = vld [vmem:[%s6 + $0x8] sm:$0xf]
        %v1577 = vld [vmem:[%s6 + $0xc] sm:$0xf]
        %v1582 = vunpack.c.l.b16 %v1574
        %v1583 = vunpack.c.l.b16 %v1575
        %v1584 = vunpack.c.l.b16 %v1576
        %v1585 = vunpack.c.l.b16 %v1577
        %v1586 = vpack.c.b16 %v1583, %v1582
        %v1587 = vpack.c.b16 %v1585, %v1584
        %vm1590 = vcmask 261120
        %v1592 = vsel %vm1590, %v1566, 0
        %v1595 = vsel %vm1590, %v1567, 0
        %v1598 = vsel %vm1590, %v1568, 0
        %v1601 = vsel %vm1590, %v1569, 0
        %v1604 = vsel %vm1590, %v1570, 0
        %v1607 = vsel %vm1590, %v1571, 0
        %v1610 = vsel %vm1590, %v1572, 0
        %v1613 = vsel %vm1590, %v1573, 0
        %1615 = vmatpush.bf16.msra.mxu0 0
        %1616 = vmatpush.bf16.msra.mxu0 0
        %1617 = vmatpush.bf16.msra.mxu0 0
        %1618 = vmatpush.bf16.msra.mxu0 0
        %1619 = vmatpush.bf16.msra.mxu0 0
        %1620 = vmatpush.bf16.msra.mxu0 0
        %1621 = vmatpush.bf16.msra.mxu0 %v1587
        %1622 = vmatpush.bf16.msra.mxu0 %v1586
        %1623 = vmatmul.bf16.gmra.mxu0 %v1592
        %v1624 = vpop.f32.mrf.mxu0
        %v1625 = vadd.f32 0.0, %v1624
        %v1626 = vpop.f32.mrf.mxu0
        %v1627 = vadd.f32 0.0, %v1626
        %1628 = vmatmul.bf16.gmra.mxu0 %v1595
        %v1629 = vpop.f32.mrf.mxu0
        %v1630 = vadd.f32 0.0, %v1629
        %v1631 = vpop.f32.mrf.mxu0
        %v1632 = vadd.f32 0.0, %v1631
        %1633 = vmatmul.bf16.gmra.mxu0 %v1598
        %v1634 = vpop.f32.mrf.mxu0
        %v1635 = vadd.f32 0.0, %v1634
        %v1636 = vpop.f32.mrf.mxu0
        %v1637 = vadd.f32 0.0, %v1636
        %1638 = vmatmul.bf16.gmra.mxu0 %v1601
        %v1639 = vpop.f32.mrf.mxu0
        %v1640 = vadd.f32 0.0, %v1639
        %v1641 = vpop.f32.mrf.mxu0
        %v1642 = vadd.f32 0.0, %v1641
        %1643 = vmatmul.bf16.gmra.mxu0 %v1604
        %v1644 = vpop.f32.mrf.mxu0
        %v1645 = vadd.f32 0.0, %v1644
        %v1646 = vpop.f32.mrf.mxu0
        %v1647 = vadd.f32 0.0, %v1646
        %1648 = vmatmul.bf16.gmra.mxu0 %v1607
        %v1649 = vpop.f32.mrf.mxu0
        %v1650 = vadd.f32 0.0, %v1649
        %v1651 = vpop.f32.mrf.mxu0
        %v1652 = vadd.f32 0.0, %v1651
        %1653 = vmatmul.bf16.gmra.mxu0 %v1610
        %v1654 = vpop.f32.mrf.mxu0
        %v1655 = vadd.f32 0.0, %v1654
        %v1656 = vpop.f32.mrf.mxu0
        %v1657 = vadd.f32 0.0, %v1656
        %1658 = vmatmul.bf16.gmra.mxu0 %v1613
        %v1659 = vpop.f32.mrf.mxu0
        %v1660 = vadd.f32 0.0, %v1659
        %v1661 = vpop.f32.mrf.mxu0
        %v1662 = vadd.f32 0.0, %v1661
        %1663 = vdwg.mxu0
        %v1664 = vld [vmem:[%s7] sm:$0x1]
        %v1666 = vperm.slane %v1664, 0
        %v1668 = vmul.f32 %v1625, %v1666
        %v1669 = vmul.f32 %v1627, %v1666
        %v1670 = vmul.f32 %v1630, %v1666
        %v1671 = vmul.f32 %v1632, %v1666
        %v1672 = vmul.f32 %v1635, %v1666
        %v1673 = vmul.f32 %v1637, %v1666
        %v1674 = vmul.f32 %v1640, %v1666
        %v1675 = vmul.f32 %v1642, %v1666
        %v1676 = vmul.f32 %v1645, %v1666
        %v1677 = vmul.f32 %v1647, %v1666
        %v1678 = vmul.f32 %v1650, %v1666
        %v1679 = vmul.f32 %v1652, %v1666
        %v1680 = vmul.f32 %v1655, %v1666
        %v1681 = vmul.f32 %v1657, %v1666
        %v1682 = vmul.f32 %v1660, %v1666
        %v1683 = vmul.f32 %v1662, %v1666
        %v1684 = vld [vmem:[%s8] sm:$0x1]
        %v1686 = vperm.slane %v1684, 0
        %v1688 = vadd.f32 %v1668, %v1686
        %v1689 = vadd.f32 %v1669, %v1686
        %v1690 = vadd.f32 %v1670, %v1686
        %v1691 = vadd.f32 %v1671, %v1686
        %v1692 = vadd.f32 %v1672, %v1686
        %v1693 = vadd.f32 %v1673, %v1686
        %v1694 = vadd.f32 %v1674, %v1686
        %v1695 = vadd.f32 %v1675, %v1686
        %v1696 = vadd.f32 %v1676, %v1686
        %v1697 = vadd.f32 %v1677, %v1686
        %v1698 = vadd.f32 %v1678, %v1686
        %v1699 = vadd.f32 %v1679, %v1686
        %v1700 = vadd.f32 %v1680, %v1686
        %v1701 = vadd.f32 %v1681, %v1686
        %v1702 = vadd.f32 %v1682, %v1686
        %v1703 = vadd.f32 %v1683, %v1686
        %v1704 = vmax.f32 %v1688, 0.0
        %v1705 = vmax.f32 %v1689, 0.0
        %v1706 = vmax.f32 %v1690, 0.0
        %v1707 = vmax.f32 %v1691, 0.0
        %v1708 = vmax.f32 %v1692, 0.0
        %v1709 = vmax.f32 %v1693, 0.0
        %v1710 = vmax.f32 %v1694, 0.0
        %v1711 = vmax.f32 %v1695, 0.0
        %v1712 = vmax.f32 %v1696, 0.0
        %v1713 = vmax.f32 %v1697, 0.0
        %v1714 = vmax.f32 %v1698, 0.0
        %v1715 = vmax.f32 %v1699, 0.0
        %v1716 = vmax.f32 %v1700, 0.0
        %v1717 = vmax.f32 %v1701, 0.0
        %v1718 = vmax.f32 %v1702, 0.0
        %v1719 = vmax.f32 %v1703, 0.0
        %v1720 = vpack.c.bf16 %v1705, %v1704
        %v1721 = vpack.c.bf16 %v1707, %v1706
        %v1722 = vpack.c.bf16 %v1709, %v1708
        %v1723 = vpack.c.bf16 %v1711, %v1710
        %v1724 = vpack.c.bf16 %v1713, %v1712
        %v1725 = vpack.c.bf16 %v1715, %v1714
        %v1726 = vpack.c.bf16 %v1717, %v1716
        %v1727 = vpack.c.bf16 %v1719, %v1718
        %v1728 = vld [vmem:[%s9] sm:$0xf]
        %v1729 = vld [vmem:[%s9 + $0x4] sm:$0xf]
        %v1730 = vld [vmem:[%s9 + $0x8] sm:$0xf]
        %v1731 = vld [vmem:[%s9 + $0xc] sm:$0xf]
        %v1732 = vld [vmem:[%s9 + $0x10] sm:$0xf]
        %v1733 = vld [vmem:[%s9 + $0x14] sm:$0xf]
        %v1734 = vld [vmem:[%s9 + $0x18] sm:$0xf]
        %v1735 = vld [vmem:[%s9 + $0x1c] sm:$0xf]
        %v1736 = vld [vmem:[%s9 + $0x20] sm:$0xf]
        %v1737 = vld [vmem:[%s9 + $0x24] sm:$0xf]
        %v1738 = vld [vmem:[%s9 + $0x28] sm:$0xf]
        %v1739 = vld [vmem:[%s9 + $0x2c] sm:$0xf]
        %v1740 = vld [vmem:[%s9 + $0x30] sm:$0xf]
        %v1741 = vld [vmem:[%s9 + $0x34] sm:$0xf]
        %v1742 = vld [vmem:[%s9 + $0x38] sm:$0xf]
        %v1743 = vld [vmem:[%s9 + $0x3c] sm:$0xf]
        %v1744 = vld [vmem:[%s10] sm:$0xf]
        %v1745 = vld [vmem:[%s10 + $0x4] sm:$0xf]
        %v1746 = vld [vmem:[%s10 + $0x8] sm:$0xf]
        %v1747 = vld [vmem:[%s10 + $0xc] sm:$0xf]
        %v1764 = vunpack.c.l.b16 %v544
        %v1765 = vunpack.c.l.b16 %v545
        %v1766 = vunpack.c.l.b16 %v546
        %v1767 = vunpack.c.l.b16 %v547
        %v1768 = vunpack.c.l.b16 %v548
        %v1769 = vunpack.c.l.b16 %v549
        %v1770 = vunpack.c.l.b16 %v550
        %v1771 = vunpack.c.l.b16 %v551
        %v1772 = vunpack.c.l.b16 %v552
        %v1773 = vunpack.c.l.b16 %v553
        %v1774 = vunpack.c.l.b16 %v554
        %v1775 = vunpack.c.l.b16 %v555
        %v1776 = vunpack.c.l.b16 %v556
        %v1777 = vunpack.c.l.b16 %v557
        %v1778 = vunpack.c.l.b16 %v558
        %v1779 = vunpack.c.l.b16 %v559
        %v1780 = vpack.c.b16 %v1765, %v1764
        %v1781 = vpack.c.b16 %v1767, %v1766
        %v1782 = vpack.c.b16 %v1769, %v1768
        %v1783 = vpack.c.b16 %v1771, %v1770
        %v1784 = vpack.c.b16 %v1773, %v1772
        %v1785 = vpack.c.b16 %v1775, %v1774
        %v1786 = vpack.c.b16 %v1777, %v1776
        %v1787 = vpack.c.b16 %v1779, %v1778
        %v1792 = vunpack.c.l.b16 %v1744
        %v1793 = vunpack.c.l.b16 %v1745
        %v1794 = vunpack.c.l.b16 %v1746
        %v1795 = vunpack.c.l.b16 %v1747
        %v1796 = vpack.c.b16 %v1793, %v1792
        %v1797 = vpack.c.b16 %v1795, %v1794
        %v1801 = vsel %vm1590, %v1780, 0
        %v1804 = vsel %vm1590, %v1781, 0
        %v1807 = vsel %vm1590, %v1782, 0
        %v1810 = vsel %vm1590, %v1783, 0
        %v1813 = vsel %vm1590, %v1784, 0
        %v1816 = vsel %vm1590, %v1785, 0
        %v1819 = vsel %vm1590, %v1786, 0
        %v1822 = vsel %vm1590, %v1787, 0
        %1824 = vmatpush.bf16.msra.mxu0 0
        %1825 = vmatpush.bf16.msra.mxu0 0
        %1826 = vmatpush.bf16.msra.mxu0 0
        %1827 = vmatpush.bf16.msra.mxu0 0
        %1828 = vmatpush.bf16.msra.mxu0 0
        %1829 = vmatpush.bf16.msra.mxu0 0
        %1830 = vmatpush.bf16.msra.mxu0 %v1797
        %1831 = vmatpush.bf16.msra.mxu0 %v1796
        %1832 = vmatmul.bf16.gmra.mxu0 %v1801
        %v1833 = vpop.f32.mrf.mxu0
        %v1834 = vadd.f32 0.0, %v1833
        %v1835 = vpop.f32.mrf.mxu0
        %v1836 = vadd.f32 0.0, %v1835
        %1837 = vmatmul.bf16.gmra.mxu0 %v1804
        %v1838 = vpop.f32.mrf.mxu0
        %v1839 = vadd.f32 0.0, %v1838
        %v1840 = vpop.f32.mrf.mxu0
        %v1841 = vadd.f32 0.0, %v1840
        %1842 = vmatmul.bf16.gmra.mxu0 %v1807
        %v1843 = vpop.f32.mrf.mxu0
        %v1844 = vadd.f32 0.0, %v1843
        %v1845 = vpop.f32.mrf.mxu0
        %v1846 = vadd.f32 0.0, %v1845
        %1847 = vmatmul.bf16.gmra.mxu0 %v1810
        %v1848 = vpop.f32.mrf.mxu0
        %v1849 = vadd.f32 0.0, %v1848
        %v1850 = vpop.f32.mrf.mxu0
        %v1851 = vadd.f32 0.0, %v1850
        %1852 = vmatmul.bf16.gmra.mxu0 %v1813
        %v1853 = vpop.f32.mrf.mxu0
        %v1854 = vadd.f32 0.0, %v1853
        %v1855 = vpop.f32.mrf.mxu0
        %v1856 = vadd.f32 0.0, %v1855
        %1857 = vmatmul.bf16.gmra.mxu0 %v1816
        %v1858 = vpop.f32.mrf.mxu0
        %v1859 = vadd.f32 0.0, %v1858
        %v1860 = vpop.f32.mrf.mxu0
        %v1861 = vadd.f32 0.0, %v1860
        %1862 = vmatmul.bf16.gmra.mxu0 %v1819
        %v1863 = vpop.f32.mrf.mxu0
        %v1864 = vadd.f32 0.0, %v1863
        %v1865 = vpop.f32.mrf.mxu0
        %v1866 = vadd.f32 0.0, %v1865
        %1867 = vmatmul.bf16.gmra.mxu0 %v1822
        %v1868 = vpop.f32.mrf.mxu0
        %v1869 = vadd.f32 0.0, %v1868
        %v1870 = vpop.f32.mrf.mxu0
        %v1871 = vadd.f32 0.0, %v1870
        %1872 = vdwg.mxu0
        %v1889 = vunpack.c.l.b16 %v1728
        %v1890 = vunpack.c.l.b16 %v1729
        %v1891 = vunpack.c.l.b16 %v1730
        %v1892 = vunpack.c.l.b16 %v1731
        %v1893 = vunpack.c.l.b16 %v1732
        %v1894 = vunpack.c.l.b16 %v1733
        %v1895 = vunpack.c.l.b16 %v1734
        %v1896 = vunpack.c.l.b16 %v1735
        %v1897 = vunpack.c.l.b16 %v1736
        %v1898 = vunpack.c.l.b16 %v1737
        %v1899 = vunpack.c.l.b16 %v1738
        %v1900 = vunpack.c.l.b16 %v1739
        %v1901 = vunpack.c.l.b16 %v1740
        %v1902 = vunpack.c.l.b16 %v1741
        %v1903 = vunpack.c.l.b16 %v1742
        %v1904 = vunpack.c.l.b16 %v1743
        %v1905 = vpack.c.b16 %v1890, %v1889
        %v1906 = vpack.c.b16 %v1892, %v1891
        %v1907 = vpack.c.b16 %v1894, %v1893
        %v1908 = vpack.c.b16 %v1896, %v1895
        %v1909 = vpack.c.b16 %v1898, %v1897
        %v1910 = vpack.c.b16 %v1900, %v1899
        %v1911 = vpack.c.b16 %v1902, %v1901
        %v1912 = vpack.c.b16 %v1904, %v1903
        %1921 = vmatpush.bf16.msra.mxu0 %v1912
        %1922 = vmatpush.bf16.msra.mxu0 %v1911
        %1923 = vmatpush.bf16.msra.mxu0 %v1910
        %1924 = vmatpush.bf16.msra.mxu0 %v1909
        %1925 = vmatpush.bf16.msra.mxu0 %v1908
        %1926 = vmatpush.bf16.msra.mxu0 %v1907
        %1927 = vmatpush.bf16.msra.mxu0 %v1906
        %1928 = vmatpush.bf16.msra.mxu0 %v1905
        %1929 = vmatmul.bf16.gmra.mxu0 %v1720
        %v1930 = vpop.f32.mrf.mxu0
        %v1931 = vadd.f32 %v1834, %v1930
        %v1932 = vpop.f32.mrf.mxu0
        %v1933 = vadd.f32 %v1836, %v1932
        %1934 = vmatmul.bf16.gmra.mxu0 %v1721
        %v1935 = vpop.f32.mrf.mxu0
        %v1936 = vadd.f32 %v1839, %v1935
        %v1937 = vpop.f32.mrf.mxu0
        %v1938 = vadd.f32 %v1841, %v1937
        %1939 = vmatmul.bf16.gmra.mxu0 %v1722
        %v1940 = vpop.f32.mrf.mxu0
        %v1941 = vadd.f32 %v1844, %v1940
        %v1942 = vpop.f32.mrf.mxu0
        %v1943 = vadd.f32 %v1846, %v1942
        %1944 = vmatmul.bf16.gmra.mxu0 %v1723
        %v1945 = vpop.f32.mrf.mxu0
        %v1946 = vadd.f32 %v1849, %v1945
        %v1947 = vpop.f32.mrf.mxu0
        %v1948 = vadd.f32 %v1851, %v1947
        %1949 = vmatmul.bf16.gmra.mxu0 %v1724
        %v1950 = vpop.f32.mrf.mxu0
        %v1951 = vadd.f32 %v1854, %v1950
        %v1952 = vpop.f32.mrf.mxu0
        %v1953 = vadd.f32 %v1856, %v1952
        %1954 = vmatmul.bf16.gmra.mxu0 %v1725
        %v1955 = vpop.f32.mrf.mxu0
        %v1956 = vadd.f32 %v1859, %v1955
        %v1957 = vpop.f32.mrf.mxu0
        %v1958 = vadd.f32 %v1861, %v1957
        %1959 = vmatmul.bf16.gmra.mxu0 %v1726
        %v1960 = vpop.f32.mrf.mxu0
        %v1961 = vadd.f32 %v1864, %v1960
        %v1962 = vpop.f32.mrf.mxu0
        %v1963 = vadd.f32 %v1866, %v1962
        %1964 = vmatmul.bf16.gmra.mxu0 %v1727
        %v1965 = vpop.f32.mrf.mxu0
        %v1966 = vadd.f32 %v1869, %v1965
        %v1967 = vpop.f32.mrf.mxu0
        %v1968 = vadd.f32 %v1871, %v1967
        %1969 = vdwg.mxu0
        %v1970 = vpack.c.bf16 %v1931, %v1931
        %v1971 = vpack.c.bf16 %v1933, %v1933
        %v1972 = vpack.c.bf16 %v1936, %v1936
        %v1973 = vpack.c.bf16 %v1938, %v1938
        %v1974 = vpack.c.bf16 %v1941, %v1941
        %v1975 = vpack.c.bf16 %v1943, %v1943
        %v1976 = vpack.c.bf16 %v1946, %v1946
        %v1977 = vpack.c.bf16 %v1948, %v1948
        %v1978 = vpack.c.bf16 %v1951, %v1951
        %v1979 = vpack.c.bf16 %v1953, %v1953
        %v1980 = vpack.c.bf16 %v1956, %v1956
        %v1981 = vpack.c.bf16 %v1958, %v1958
        %v1982 = vpack.c.bf16 %v1961, %v1961
        %v1983 = vpack.c.bf16 %v1963, %v1963
        %v1984 = vpack.c.bf16 %v1966, %v1966
        %v1985 = vpack.c.bf16 %v1968, %v1968
        %1986 = vst [vmem:[%s496] sm:$0xf] %v1970
        %1987 = vst [vmem:[%s496 + $0x4] sm:$0xf] %v1971
        %1988 = vst [vmem:[%s496 + $0x8] sm:$0xf] %v1972
        %1989 = vst [vmem:[%s496 + $0xc] sm:$0xf] %v1973
        %1990 = vst [vmem:[%s496 + $0x10] sm:$0xf] %v1974
        %1991 = vst [vmem:[%s496 + $0x14] sm:$0xf] %v1975
        %1992 = vst [vmem:[%s496 + $0x18] sm:$0xf] %v1976
        %1993 = vst [vmem:[%s496 + $0x1c] sm:$0xf] %v1977
        %1994 = vst [vmem:[%s496 + $0x20] sm:$0xf] %v1978
        %1995 = vst [vmem:[%s496 + $0x24] sm:$0xf] %v1979
        %1996 = vst [vmem:[%s496 + $0x28] sm:$0xf] %v1980
        %1997 = vst [vmem:[%s496 + $0x2c] sm:$0xf] %v1981
        %1998 = vst [vmem:[%s496 + $0x30] sm:$0xf] %v1982
        %1999 = vst [vmem:[%s496 + $0x34] sm:$0xf] %v1983
        %2000 = vst [vmem:[%s496 + $0x38] sm:$0xf] %v1984
        %2001 = vst [vmem:[%s496 + $0x3c] sm:$0xf] %v1985
        %s2002 = sand.u32 %s315, 1
        %s2003 = scalar_lea.sflag [#allocation3], %s2002
        %s2004 = sand.u32 %s315, 1
        %s2005 = smul.addr %s2004, 64
        %s2006 = scalar_lea.vmem [#allocation2], %s2005
        // Predicated region
        $region65: #{_lambda_.1} parent=63 // pred_check
          %p2007 = pneg %p325
        $region66: #{_lambda_.1} parent=63 // pred_check_branch
          %2009 = sbr.rel (%p2007) target = $region68
        $region67: #{_lambda_.1} parent=63 // pred_region
          %s2010 = smul.u32 8, %s30
          %2012 = vsyncadd %s2003, 0
          %s2013 = smul.addr %s2010, 2
          %s2014 = smul.addr %s29, 32
          %s2015 = sadd.s32 %s2013, %s2014
          %s2016 = smul.addr %s2015, 4
          %s2017 = scalar_lea.hbm %s11, %s2016
          %s2018 = sshll.u32 %s2006, 4
          %s2019 = int_to_ptr.vmem [resolvable:$true] %s2018
          %s2020 = sshll.u32 %s2017, 4
          %s2021 = int_to_ptr.hbm [resolvable:$true] %s2020
          %2026 = dma.vmem_to_hbm [thread:$0]  %s2019, 1024, %s2021, %s2003, 64, 64, 4
        $region68: #{_lambda_.1} parent=63 // pred_fallthru
          _
      $region64: #{_lambda_.1} parent=5 // pred_fallthru
        _
      %p2027 = scmp.le.s32.totalorder 2, %s20
      // Predicated region
      $region69: #{_lambda_.1} parent=5 // pred_check
        %p2028 = pneg %p2027
      $region70: #{_lambda_.1} parent=5 // pred_check_branch
        %2030 = sbr.rel (%p2028) target = $region72
      $region71: #{_lambda_.1} parent=5 // pred_region
        %s2031 = ssub.s32 %s20, 2
        // Predicated region
        $region73: #{_lambda_.1} parent=71 // pred_check
          %p2032 = pneg %p331
        $region74: #{_lambda_.1} parent=71 // pred_check_branch
          %2034 = sbr.rel (%p2032) target = $region76
        $region75: #{_lambda_.1} parent=71 // pred_region
          %s2035 = sand.u32 %s316, 1
          %s2036 = scalar_lea.sflag [#allocation3], %s2035
          %s2037 = sand.u32 %s316, 1
          %s2038 = smul.addr %s2037, 64
          %s2039 = scalar_lea.vmem [#allocation2], %s2038
          %2041 = dma.done %s2036, 1024
        $region76: #{_lambda_.1} parent=71 // pred_fallthru
          _
      $region72: #{_lambda_.1} parent=5 // pred_fallthru
        _
    $region6: #{_lambda_.1} parent=1 // loop_footer
      %s24 = sadd.s32 1, %s20
    $region7: #{_lambda_.1} parent=1 // loop_footer_branch
      %19 = sbr.rel target = $region3
    $region8: #{_lambda_.1} parent=1 // loop_exit
      _
    %2042 = vsyncpa [#allocation3], 1
    %s2043 = scalar_lea.sflag [#allocation3], 1
    %2044 = vsyncpa %s2043, 1

</llo_original>
